<compile_context>
chip_gen: v7x
topology: tpu7x:2x2x1
jax: 0.10.0
libtpu: 0.0.40
codegen_flags: <defaults>
</compile_context>

<pallas_src>
import functools

import numpy as np
import jax
import jax.numpy as jnp
from jax import lax
from jax.experimental import pallas as pl
from jax.experimental.pallas import tpu as pltpu

EPS = 1e-5


# ------------------------------ Pallas kernel --------------------------------
def basic_block_kernel(x_ref, g1_ref, b1_ref, m1_ref, g2_ref, b2_ref, m2_ref,
                       ms_ref, p1_ref, p1t_ref, p2_ref, p2t_ref, o_ref, *, H):
    """Fused pre-activation BasicBlock, all activations lane-dense.

      x_ref : (N*H, W*Cin)       input (NHWC flattened, W*Cin on lanes)
      o_ref : (N*H, W*Cout)      output (lane-dense, full-width stores)
      m1_ref: (3*W*Cin,  W*Cout) conv1 folded to a block-Toeplitz matrix
      m2_ref: (3*W*Cout, W*Cout) conv2 folded to a block-Toeplitz matrix
      ms_ref: (W*Cin,    W*Cout) 1x1 shortcut as a block-diagonal matrix
      p*/p*t: (W*C, C) / (C, W*C) 0/1 channel selectors (BN reduce / broadcast)
      g*/b* : (1, C) BN affine parameters
    """
    nh = x_ref.shape[0]
    f32 = jnp.float32

    def bn_relu(a, g_ref, b_ref, p_ref, pt_ref):
        # Per-channel batch statistics (biased variance), staying lane-dense:
        # the strided "sum over W per channel" rides the MXU via the 0/1
        # selector p; the per-channel -> per-lane broadcast uses p^T.
        cnt = nh * (a.shape[1] // p_ref.shape[1])          # N*H*W (static)
        inv_cnt = 1.0 / cnt
        sum_c = jnp.sum(jnp.dot(a, p_ref[...], preferred_element_type=f32),
                        axis=0, keepdims=True)             # (1, C)
        mean_c = sum_c * inv_cnt
        mean_l = jnp.dot(mean_c, pt_ref[...], preferred_element_type=f32)
        ac = a - mean_l                                    # centered; reused
        var_c = jnp.sum(jnp.dot(ac * ac, p_ref[...], preferred_element_type=f32),
                        axis=0, keepdims=True) * inv_cnt   # biased variance
        scale_c = g_ref[...] * lax.rsqrt(var_c + EPS)      # (1, C)
        scale_l = jnp.dot(scale_c, pt_ref[...], preferred_element_type=f32)
        bias_l = jnp.dot(b_ref[...], pt_ref[...], preferred_element_type=f32)
        return jnp.maximum(ac * scale_l + bias_l, 0.0)

    def row_shift_cat(a):
        # [row r-1 | row r | row r+1] concatenated on lanes, zero-filled at
        # each image's top/bottom edge (the conv's H-direction pad=1).
        # pltpu.roll uses the XLU slot; the masks handle both the zero padding
        # and the image boundaries inside the flattened (N*H) row axis.
        row = lax.broadcasted_iota(jnp.int32, a.shape, 0) % H
        up = jnp.where(row == 0, 0.0, pltpu.roll(a, 1, axis=0))           # a[r-1]
        dn = jnp.where(row == H - 1, 0.0, pltpu.roll(a, nh - 1, axis=0))  # a[r+1]
        return jnp.concatenate([up, a, dn], axis=1)

    # h = relu(bn1(x))
    h = bn_relu(x_ref[...], g1_ref, b1_ref, p1_ref, p1t_ref)    # (N*H, W*Cin)
    # shortcut: 1x1 conv, lands directly in the output layout
    r = jnp.dot(h, ms_ref[...], preferred_element_type=f32)     # (N*H, W*Cout)
    # conv1: a single matmul
    y1 = jnp.dot(row_shift_cat(h), m1_ref[...], preferred_element_type=f32)
    # relu(bn2(y1)) then conv2: a single matmul
    h2 = bn_relu(y1, g2_ref, b2_ref, p2_ref, p2t_ref)           # (N*H, W*Cout)
    y2 = jnp.dot(row_shift_cat(h2), m2_ref[...], preferred_element_type=f32)
    # out = conv2(...) * 0.2 + shortcut   (single full-width lane-dense store)
    o_ref[...] = y2 * 0.2 + r


# --------------------------- weight / selector folds --------------------------
def _fold_conv3x3(w_hwio, width):
    """(3,3,Ci,Co) -> (3*W*Ci, W*Co) block-Toeplitz matrix M so that, in the
    lane-dense layout, conv3x3(h) == [h(r-1)|h(r)|h(r+1)] @ M.
    Row index = dy*(W*Ci) + w_src*Ci + ci ; col index = w_out*Co + co."""
    _, _, ci, co = w_hwio.shape
    w_src = np.arange(width)[:, None]
    w_out = np.arange(width)[None, :]
    # sel[dx_idx, w_src, w_out] = 1 iff w_src == w_out + (dx_idx - 1)
    sel = np.stack([(w_src == w_out + d).astype(np.float32) for d in (-1, 0, 1)])
    m = jnp.einsum("xsw,yxio->ysiwo", jnp.asarray(sel), w_hwio,
                   precision=lax.Precision.HIGHEST)
    return m.reshape(3 * width * ci, width * co)


def _fold_conv1x1(w_io, width):
    """(Ci,Co) -> (W*Ci, W*Co) block-diagonal matrix for the 1x1 shortcut.
    (Pass w_io = identity for the ni == nf identity-shortcut case.)"""
    return jnp.kron(jnp.eye(width, dtype=jnp.float32), w_io)


def _chan_selector(c, width):
    """0/1 selectors: p (W*C, C) folds lanes into channels; p.T broadcasts back."""
    p = np.tile(np.eye(c, dtype=np.float32), (width, 1))
    return jnp.asarray(p), jnp.asarray(p.T)


# --------------------------------- wrapper ------------------------------------
def basic_block_forward(x_nchw, params):
    """x_nchw: (N, Cin, H, W) float32 -> (N, Cout, H, W) float32."""
    g1, b1, w1, g2, b2, w2, ws = params
    N, Cin, H, W = x_nchw.shape
    Cout = w1.shape[-1]

    # NCHW -> lane-dense (N*H, W*Cin).  TODO(synk): keep the surrounding model
    # in this layout so these tiny boundary transposes disappear entirely.
    x2d = jnp.transpose(x_nchw, (0, 2, 3, 1)).reshape(N * H, W * Cin)

    m1 = _fold_conv3x3(w1, W)
    m2 = _fold_conv3x3(w2, W)
    msc = _fold_conv1x1(ws, W)
    p1, p1t = _chan_selector(Cin, W)
    p2, p2t = _chan_selector(Cout, W)

    vmem = pl.BlockSpec(memory_space=pltpu.MemorySpace.VMEM)
    out2d = pl.pallas_call(
        functools.partial(basic_block_kernel, H=H),
        out_shape=jax.ShapeDtypeStruct((N * H, W * Cout), jnp.float32),
        in_specs=[vmem] * 12,
        out_specs=vmem,
    )(x2d, g1, b1, m1, g2, b2, m2, msc, p1, p1t, p2, p2t)

    return jnp.transpose(out2d.reshape(N, H, W, Cout), (0, 3, 1, 2))


# ----------------------------- pure-JAX reference ------------------------------
def _bn_relu_nhwc(x, g, b):
    mean = jnp.mean(x, axis=(0, 1, 2), keepdims=True)
    var = jnp.mean((x - mean) ** 2, axis=(0, 1, 2), keepdims=True)
    y = (x - mean) * lax.rsqrt(var + EPS)
    y = y * g.reshape(1, 1, 1, -1) + b.reshape(1, 1, 1, -1)
    return jnp.maximum(y, 0.0)


def reference_forward(x_nchw, params):
    g1, b1, w1, g2, b2, w2, ws = params
    dn = ("NHWC", "HWIO", "NHWC")
    hp = lax.Precision.HIGHEST
    x = jnp.transpose(x_nchw, (0, 2, 3, 1))
    h = _bn_relu_nhwc(x, g1, b1)
    r = lax.conv_general_dilated(h, ws.reshape(1, 1, *ws.shape), (1, 1), "VALID",
                                 dimension_numbers=dn, precision=hp)
    y1 = lax.conv_general_dilated(h, w1, (1, 1), "SAME",
                                  dimension_numbers=dn, precision=hp)
    h2 = _bn_relu_nhwc(y1, g2, b2)
    y2 = lax.conv_general_dilated(h2, w2, (1, 1), "SAME",
                                  dimension_numbers=dn, precision=hp)
    out = y2 * 0.2 + r
    return jnp.transpose(out, (0, 3, 1, 2))


if __name__ == "__main__":
    # BasicBlock(ni=4, nf=8, stride=1): ni != nf -> 1x1 conv shortcut.
    N, ni, nf, H, W = 2, 4, 8, 16, 16

    key = jax.random.PRNGKey(0)
    kx, k1, k2, k3, k4, k5, k6, k7 = jax.random.split(key, 8)

    x = jax.random.normal(kx, (N, ni, H, W), jnp.float32)

    g1 = 1.0 + 0.1 * jax.random.normal(k1, (1, ni), jnp.float32)   # bn1 weight
    b1 = 0.1 * jax.random.normal(k2, (1, ni), jnp.float32)         # bn1 bias
    w1 = 0.1 * jax.random.normal(k3, (3, 3, ni, nf), jnp.float32)  # conv1 (HWIO)
    g2 = 1.0 + 0.1 * jax.random.normal(k4, (1, nf), jnp.float32)   # bn2 weight
    b2 = 0.1 * jax.random.normal(k5, (1, nf), jnp.float32)         # bn2 bias
    w2 = 0.1 * jax.random.normal(k6, (3, 3, nf, nf), jnp.float32)  # conv2 (HWIO)
    ws = 0.1 * jax.random.normal(k7, (ni, nf), jnp.float32)        # shortcut 1x1

    params = (g1, b1, w1, g2, b2, w2, ws)

    fwd = jax.jit(basic_block_forward)
    out = jax.block_until_ready(fwd(x, params))
    ref = jax.block_until_ready(reference_forward(x, params))

    assert out.shape == (N, nf, H, W), out.shape
    # All-f32 path -> tolerance tightened 10x vs the previous version.
    np.testing.assert_allclose(np.asarray(out), np.asarray(ref),
                               rtol=1e-3, atol=1e-3)

    print("KERNEL_OK")
</pallas_src>

<mosaic_0001>
module attributes {stable_mosaic.version = 11 : i64} {
  func.func @basic_block_kernel(%arg0: memref<32x64xf32, #tpu.memory_space<vmem>>, %arg1: memref<1x4xf32, #tpu.memory_space<vmem>>, %arg2: memref<1x4xf32, #tpu.memory_space<vmem>>, %arg3: memref<192x128xf32, #tpu.memory_space<vmem>>, %arg4: memref<1x8xf32, #tpu.memory_space<vmem>>, %arg5: memref<1x8xf32, #tpu.memory_space<vmem>>, %arg6: memref<384x128xf32, #tpu.memory_space<vmem>>, %arg7: memref<64x128xf32, #tpu.memory_space<vmem>>, %arg8: memref<64x4xf32, #tpu.memory_space<vmem>>, %arg9: memref<4x64xf32, #tpu.memory_space<vmem>>, %arg10: memref<128x8xf32, #tpu.memory_space<vmem>>, %arg11: memref<8x128xf32, #tpu.memory_space<vmem>>, %arg12: memref<32x128xf32, #tpu.memory_space<vmem>>) attributes {dimension_semantics = [], scalar_prefetch = 0 : i64, scratch_operands = 0 : i64, tpu.core_type = #tpu.core_type<tc>} {
    %c0 = arith.constant 0 : index
    %c0_0 = arith.constant 0 : index
    %0 = vector.load %arg0[%c0, %c0_0] : memref<32x64xf32, #tpu.memory_space<vmem>>, vector<32x64xf32>
    %c0_1 = arith.constant 0 : index
    %c0_2 = arith.constant 0 : index
    %1 = vector.load %arg8[%c0_1, %c0_2] : memref<64x4xf32, #tpu.memory_space<vmem>>, vector<64x4xf32>
    %cst = arith.constant dense<0.000000e+00> : vector<32x4xf32>
    %2 = tpu.matmul %0, %1, %cst {dimension_numbers = #tpu.dot_dimension_numbers<[1], [0], [0], [1], [0, 0, 1, 1], [], []>} : vector<32x64xf32>, vector<64x4xf32>, vector<32x4xf32> -> vector<32x4xf32>
    %cst_3 = arith.constant dense<0.000000e+00> : vector<4xf32>
    %3 = vector.multi_reduction <add>, %2, %cst_3 [0] : vector<32x4xf32> to vector<4xf32>
    %4 = vector.shape_cast %3 : vector<4xf32> to vector<1x4xf32>
    %cst_4 = arith.constant 0.001953125 : f32
    %5 = vector.broadcast %cst_4 : f32 to vector<1x4xf32>
    %6 = arith.mulf %4, %5 : vector<1x4xf32>
    %c0_5 = arith.constant 0 : index
    %c0_6 = arith.constant 0 : index
    %7 = vector.load %arg9[%c0_5, %c0_6] : memref<4x64xf32, #tpu.memory_space<vmem>>, vector<4x64xf32>
    %cst_7 = arith.constant dense<0.000000e+00> : vector<1x64xf32>
    %8 = tpu.matmul %6, %7, %cst_7 {dimension_numbers = #tpu.dot_dimension_numbers<[1], [0], [0], [1], [0, 0, 1, 1], [], []>} : vector<1x4xf32>, vector<4x64xf32>, vector<1x64xf32> -> vector<1x64xf32>
    %9 = vector.broadcast %8 : vector<1x64xf32> to vector<32x64xf32>
    %10 = arith.subf %0, %9 : vector<32x64xf32>
    %11 = arith.mulf %10, %10 : vector<32x64xf32>
    %c0_8 = arith.constant 0 : index
    %c0_9 = arith.constant 0 : index
    %12 = vector.load %arg8[%c0_8, %c0_9] : memref<64x4xf32, #tpu.memory_space<vmem>>, vector<64x4xf32>
    %cst_10 = arith.constant dense<0.000000e+00> : vector<32x4xf32>
    %13 = tpu.matmul %11, %12, %cst_10 {dimension_numbers = #tpu.dot_dimension_numbers<[1], [0], [0], [1], [0, 0, 1, 1], [], []>} : vector<32x64xf32>, vector<64x4xf32>, vector<32x4xf32> -> vector<32x4xf32>
    %cst_11 = arith.constant dense<0.000000e+00> : vector<4xf32>
    %14 = vector.multi_reduction <add>, %13, %cst_11 [0] : vector<32x4xf32> to vector<4xf32>
    %15 = vector.shape_cast %14 : vector<4xf32> to vector<1x4xf32>
    %cst_12 = arith.constant 0.001953125 : f32
    %16 = vector.broadcast %cst_12 : f32 to vector<1x4xf32>
    %17 = arith.mulf %15, %16 : vector<1x4xf32>
    %c0_13 = arith.constant 0 : index
    %c0_14 = arith.constant 0 : index
    %18 = vector.load %arg1[%c0_13, %c0_14] : memref<1x4xf32, #tpu.memory_space<vmem>>, vector<1x4xf32>
    %cst_15 = arith.constant 9.99999974E-6 : f32
    %19 = vector.broadcast %cst_15 : f32 to vector<1x4xf32>
    %20 = arith.addf %17, %19 : vector<1x4xf32>
    %21 = math.rsqrt %20 : vector<1x4xf32>
    %22 = arith.mulf %18, %21 : vector<1x4xf32>
    %c0_16 = arith.constant 0 : index
    %c0_17 = arith.constant 0 : index
    %23 = vector.load %arg9[%c0_16, %c0_17] : memref<4x64xf32, #tpu.memory_space<vmem>>, vector<4x64xf32>
    %cst_18 = arith.constant dense<0.000000e+00> : vector<1x64xf32>
    %24 = tpu.matmul %22, %23, %cst_18 {dimension_numbers = #tpu.dot_dimension_numbers<[1], [0], [0], [1], [0, 0, 1, 1], [], []>} : vector<1x4xf32>, vector<4x64xf32>, vector<1x64xf32> -> vector<1x64xf32>
    %c0_19 = arith.constant 0 : index
    %c0_20 = arith.constant 0 : index
    %25 = vector.load %arg2[%c0_19, %c0_20] : memref<1x4xf32, #tpu.memory_space<vmem>>, vector<1x4xf32>
    %c0_21 = arith.constant 0 : index
    %c0_22 = arith.constant 0 : index
    %26 = vector.load %arg9[%c0_21, %c0_22] : memref<4x64xf32, #tpu.memory_space<vmem>>, vector<4x64xf32>
    %cst_23 = arith.constant dense<0.000000e+00> : vector<1x64xf32>
    %27 = tpu.matmul %25, %26, %cst_23 {dimension_numbers = #tpu.dot_dimension_numbers<[1], [0], [0], [1], [0, 0, 1, 1], [], []>} : vector<1x4xf32>, vector<4x64xf32>, vector<1x64xf32> -> vector<1x64xf32>
    %28 = vector.broadcast %24 : vector<1x64xf32> to vector<32x64xf32>
    %29 = arith.mulf %10, %28 : vector<32x64xf32>
    %30 = vector.broadcast %27 : vector<1x64xf32> to vector<32x64xf32>
    %31 = arith.addf %29, %30 : vector<32x64xf32>
    %cst_24 = arith.constant 0.000000e+00 : f32
    %32 = vector.broadcast %cst_24 : f32 to vector<32x64xf32>
    %33 = arith.maximumf %31, %32 : vector<32x64xf32>
    %c0_25 = arith.constant 0 : index
    %c0_26 = arith.constant 0 : index
    %34 = vector.load %arg7[%c0_25, %c0_26] : memref<64x128xf32, #tpu.memory_space<vmem>>, vector<64x128xf32>
    %cst_27 = arith.constant dense<0.000000e+00> : vector<32x128xf32>
    %35 = tpu.matmul %33, %34, %cst_27 {dimension_numbers = #tpu.dot_dimension_numbers<[1], [0], [0], [1], [0, 0, 1, 1], [], []>} : vector<32x64xf32>, vector<64x128xf32>, vector<32x128xf32> -> vector<32x128xf32>
    %36 = tpu.iota {dimensions = array<i32: 0>} : vector<32x64xi32>
    %c16_i32 = arith.constant 16 : i32
    %c0_i32 = arith.constant 0 : i32
    %37 = arith.cmpi eq, %c16_i32, %c0_i32 : i32
    %c1_i32 = arith.constant 1 : i32
    %38 = arith.select %37, %c1_i32, %c16_i32 : i32
    %39 = vector.broadcast %38 : i32 to vector<32x64xi32>
    %40 = arith.remsi %36, %39 : vector<32x64xi32>
    %c0_i32_28 = arith.constant 0 : i32
    %41 = vector.broadcast %c0_i32_28 : i32 to vector<32x64xi32>
    %42 = arith.cmpi ne, %40, %41 : vector<32x64xi32>
    %c0_i32_29 = arith.constant 0 : i32
    %43 = vector.broadcast %c0_i32_29 : i32 to vector<32x64xi32>
    %44 = arith.cmpi slt, %40, %43 : vector<32x64xi32>
    %c0_i32_30 = arith.constant 0 : i32
    %45 = arith.cmpi slt, %38, %c0_i32_30 : i32
    %46 = vector.broadcast %45 : i1 to vector<32x64xi1>
    %47 = vector.broadcast %46 : vector<32x64xi1> to vector<32x64xi1>
    %48 = arith.xori %44, %47 : vector<32x64xi1>
    %49 = arith.andi %48, %42 : vector<32x64xi1>
    %50 = vector.broadcast %38 : i32 to vector<32x64xi32>
    %51 = arith.addi %40, %50 : vector<32x64xi32>
    %52 = arith.select %49, %51, %40 : vector<32x64xi1>, vector<32x64xi32>
    %c0_i32_31 = arith.constant 0 : i32
    %53 = vector.broadcast %c0_i32_31 : i32 to vector<32x64xi32>
    %54 = arith.cmpi eq, %52, %53 : vector<32x64xi32>
    %c1_i32_32 = arith.constant 1 : i32
    %55 = tpu.dynamic_rotate %33 by %c1_i32_32 dim 0 : vector<32x64xf32>, i32 -> vector<32x64xf32>
    %cst_33 = arith.constant 0.000000e+00 : f32
    %56 = vector.broadcast %cst_33 : f32 to vector<32x64xf32>
    %57 = arith.select %54, %56, %55 : vector<32x64xi1>, vector<32x64xf32>
    %c15_i32 = arith.constant 15 : i32
    %58 = vector.broadcast %c15_i32 : i32 to vector<32x64xi32>
    %59 = arith.cmpi eq, %52, %58 : vector<32x64xi32>
    %c31_i32 = arith.constant 31 : i32
    %60 = tpu.dynamic_rotate %33 by %c31_i32 dim 0 : vector<32x64xf32>, i32 -> vector<32x64xf32>
    %cst_34 = arith.constant 0.000000e+00 : f32
    %61 = vector.broadcast %cst_34 : f32 to vector<32x64xf32>
    %62 = arith.select %59, %61, %60 : vector<32x64xi1>, vector<32x64xf32>
    %63 = tpu.concatenate %57, %33, %62 in 1 : vector<32x64xf32>, vector<32x64xf32>, vector<32x64xf32> -> vector<32x192xf32>
    %c0_35 = arith.constant 0 : index
    %c0_36 = arith.constant 0 : index
    %64 = vector.load %arg3[%c0_35, %c0_36] : memref<192x128xf32, #tpu.memory_space<vmem>>, vector<192x128xf32>
    %cst_37 = arith.constant dense<0.000000e+00> : vector<32x128xf32>
    %65 = tpu.matmul %63, %64, %cst_37 {dimension_numbers = #tpu.dot_dimension_numbers<[1], [0], [0], [1], [0, 0, 1, 1], [], []>} : vector<32x192xf32>, vector<192x128xf32>, vector<32x128xf32> -> vector<32x128xf32>
    %c0_38 = arith.constant 0 : index
    %c0_39 = arith.constant 0 : index
    %66 = vector.load %arg10[%c0_38, %c0_39] : memref<128x8xf32, #tpu.memory_space<vmem>>, vector<128x8xf32>
    %cst_40 = arith.constant dense<0.000000e+00> : vector<32x8xf32>
    %67 = tpu.matmul %65, %66, %cst_40 {dimension_numbers = #tpu.dot_dimension_numbers<[1], [0], [0], [1], [0, 0, 1, 1], [], []>} : vector<32x128xf32>, vector<128x8xf32>, vector<32x8xf32> -> vector<32x8xf32>
    %cst_41 = arith.constant dense<0.000000e+00> : vector<8xf32>
    %68 = vector.multi_reduction <add>, %67, %cst_41 [0] : vector<32x8xf32> to vector<8xf32>
    %69 = vector.shape_cast %68 : vector<8xf32> to vector<1x8xf32>
    %cst_42 = arith.constant 0.001953125 : f32
    %70 = vector.broadcast %cst_42 : f32 to vector<1x8xf32>
    %71 = arith.mulf %69, %70 : vector<1x8xf32>
    %c0_43 = arith.constant 0 : index
    %c0_44 = arith.constant 0 : index
    %72 = vector.load %arg11[%c0_43, %c0_44] : memref<8x128xf32, #tpu.memory_space<vmem>>, vector<8x128xf32>
    %cst_45 = arith.constant dense<0.000000e+00> : vector<1x128xf32>
    %73 = tpu.matmul %71, %72, %cst_45 {dimension_numbers = #tpu.dot_dimension_numbers<[1], [0], [0], [1], [0, 0, 1, 1], [], []>} : vector<1x8xf32>, vector<8x128xf32>, vector<1x128xf32> -> vector<1x128xf32>
    %74 = vector.broadcast %73 : vector<1x128xf32> to vector<32x128xf32>
    %75 = arith.subf %65, %74 : vector<32x128xf32>
    %76 = arith.mulf %75, %75 : vector<32x128xf32>
    %c0_46 = arith.constant 0 : index
    %c0_47 = arith.constant 0 : index
    %77 = vector.load %arg10[%c0_46, %c0_47] : memref<128x8xf32, #tpu.memory_space<vmem>>, vector<128x8xf32>
    %cst_48 = arith.constant dense<0.000000e+00> : vector<32x8xf32>
    %78 = tpu.matmul %76, %77, %cst_48 {dimension_numbers = #tpu.dot_dimension_numbers<[1], [0], [0], [1], [0, 0, 1, 1], [], []>} : vector<32x128xf32>, vector<128x8xf32>, vector<32x8xf32> -> vector<32x8xf32>
    %cst_49 = arith.constant dense<0.000000e+00> : vector<8xf32>
    %79 = vector.multi_reduction <add>, %78, %cst_49 [0] : vector<32x8xf32> to vector<8xf32>
    %80 = vector.shape_cast %79 : vector<8xf32> to vector<1x8xf32>
    %cst_50 = arith.constant 0.001953125 : f32
    %81 = vector.broadcast %cst_50 : f32 to vector<1x8xf32>
    %82 = arith.mulf %80, %81 : vector<1x8xf32>
    %c0_51 = arith.constant 0 : index
    %c0_52 = arith.constant 0 : index
    %83 = vector.load %arg4[%c0_51, %c0_52] : memref<1x8xf32, #tpu.memory_space<vmem>>, vector<1x8xf32>
    %cst_53 = arith.constant 9.99999974E-6 : f32
    %84 = vector.broadcast %cst_53 : f32 to vector<1x8xf32>
    %85 = arith.addf %82, %84 : vector<1x8xf32>
    %86 = math.rsqrt %85 : vector<1x8xf32>
    %87 = arith.mulf %83, %86 : vector<1x8xf32>
    %c0_54 = arith.constant 0 : index
    %c0_55 = arith.constant 0 : index
    %88 = vector.load %arg11[%c0_54, %c0_55] : memref<8x128xf32, #tpu.memory_space<vmem>>, vector<8x128xf32>
    %cst_56 = arith.constant dense<0.000000e+00> : vector<1x128xf32>
    %89 = tpu.matmul %87, %88, %cst_56 {dimension_numbers = #tpu.dot_dimension_numbers<[1], [0], [0], [1], [0, 0, 1, 1], [], []>} : vector<1x8xf32>, vector<8x128xf32>, vector<1x128xf32> -> vector<1x128xf32>
    %c0_57 = arith.constant 0 : index
    %c0_58 = arith.constant 0 : index
    %90 = vector.load %arg5[%c0_57, %c0_58] : memref<1x8xf32, #tpu.memory_space<vmem>>, vector<1x8xf32>
    %c0_59 = arith.constant 0 : index
    %c0_60 = arith.constant 0 : index
    %91 = vector.load %arg11[%c0_59, %c0_60] : memref<8x128xf32, #tpu.memory_space<vmem>>, vector<8x128xf32>
    %cst_61 = arith.constant dense<0.000000e+00> : vector<1x128xf32>
    %92 = tpu.matmul %90, %91, %cst_61 {dimension_numbers = #tpu.dot_dimension_numbers<[1], [0], [0], [1], [0, 0, 1, 1], [], []>} : vector<1x8xf32>, vector<8x128xf32>, vector<1x128xf32> -> vector<1x128xf32>
    %93 = vector.broadcast %89 : vector<1x128xf32> to vector<32x128xf32>
    %94 = arith.mulf %75, %93 : vector<32x128xf32>
    %95 = vector.broadcast %92 : vector<1x128xf32> to vector<32x128xf32>
    %96 = arith.addf %94, %95 : vector<32x128xf32>
    %cst_62 = arith.constant 0.000000e+00 : f32
    %97 = vector.broadcast %cst_62 : f32 to vector<32x128xf32>
    %98 = arith.maximumf %96, %97 : vector<32x128xf32>
    %99 = tpu.iota {dimensions = array<i32: 0>} : vector<32x128xi32>
    %c16_i32_63 = arith.constant 16 : i32
    %c0_i32_64 = arith.constant 0 : i32
    %100 = arith.cmpi eq, %c16_i32_63, %c0_i32_64 : i32
    %c1_i32_65 = arith.constant 1 : i32
    %101 = arith.select %100, %c1_i32_65, %c16_i32_63 : i32
    %102 = vector.broadcast %101 : i32 to vector<32x128xi32>
    %103 = arith.remsi %99, %102 : vector<32x128xi32>
    %c0_i32_66 = arith.constant 0 : i32
    %104 = vector.broadcast %c0_i32_66 : i32 to vector<32x128xi32>
    %105 = arith.cmpi ne, %103, %104 : vector<32x128xi32>
    %c0_i32_67 = arith.constant 0 : i32
    %106 = vector.broadcast %c0_i32_67 : i32 to vector<32x128xi32>
    %107 = arith.cmpi slt, %103, %106 : vector<32x128xi32>
    %c0_i32_68 = arith.constant 0 : i32
    %108 = arith.cmpi slt, %101, %c0_i32_68 : i32
    %109 = vector.broadcast %108 : i1 to vector<32x128xi1>
    %110 = vector.broadcast %109 : vector<32x128xi1> to vector<32x128xi1>
    %111 = arith.xori %107, %110 : vector<32x128xi1>
    %112 = arith.andi %111, %105 : vector<32x128xi1>
    %113 = vector.broadcast %101 : i32 to vector<32x128xi32>
    %114 = arith.addi %103, %113 : vector<32x128xi32>
    %115 = arith.select %112, %114, %103 : vector<32x128xi1>, vector<32x128xi32>
    %c0_i32_69 = arith.constant 0 : i32
    %116 = vector.broadcast %c0_i32_69 : i32 to vector<32x128xi32>
    %117 = arith.cmpi eq, %115, %116 : vector<32x128xi32>
    %c1_i32_70 = arith.constant 1 : i32
    %118 = tpu.dynamic_rotate %98 by %c1_i32_70 dim 0 : vector<32x128xf32>, i32 -> vector<32x128xf32>
    %cst_71 = arith.constant 0.000000e+00 : f32
    %119 = vector.broadcast %cst_71 : f32 to vector<32x128xf32>
    %120 = arith.select %117, %119, %118 : vector<32x128xi1>, vector<32x128xf32>
    %c15_i32_72 = arith.constant 15 : i32
    %121 = vector.broadcast %c15_i32_72 : i32 to vector<32x128xi32>
    %122 = arith.cmpi eq, %115, %121 : vector<32x128xi32>
    %c31_i32_73 = arith.constant 31 : i32
    %123 = tpu.dynamic_rotate %98 by %c31_i32_73 dim 0 : vector<32x128xf32>, i32 -> vector<32x128xf32>
    %cst_74 = arith.constant 0.000000e+00 : f32
    %124 = vector.broadcast %cst_74 : f32 to vector<32x128xf32>
    %125 = arith.select %122, %124, %123 : vector<32x128xi1>, vector<32x128xf32>
    %126 = tpu.concatenate %120, %98, %125 in 1 : vector<32x128xf32>, vector<32x128xf32>, vector<32x128xf32> -> vector<32x384xf32>
    %c0_75 = arith.constant 0 : index
    %c0_76 = arith.constant 0 : index
    %127 = vector.load %arg6[%c0_75, %c0_76] : memref<384x128xf32, #tpu.memory_space<vmem>>, vector<384x128xf32>
    %cst_77 = arith.constant dense<0.000000e+00> : vector<32x128xf32>
    %128 = tpu.matmul %126, %127, %cst_77 {dimension_numbers = #tpu.dot_dimension_numbers<[1], [0], [0], [1], [0, 0, 1, 1], [], []>} : vector<32x384xf32>, vector<384x128xf32>, vector<32x128xf32> -> vector<32x128xf32>
    %cst_78 = arith.constant 2.000000e-01 : f32
    %129 = vector.broadcast %cst_78 : f32 to vector<32x128xf32>
    %130 = arith.mulf %128, %129 : vector<32x128xf32>
    %131 = arith.addf %130, %35 : vector<32x128xf32>
    %c0_79 = arith.constant 0 : index
    %c0_80 = arith.constant 0 : index
    %132 = vector.load %arg12[%c0_79, %c0_80] : memref<32x128xf32, #tpu.memory_space<vmem>>, vector<32x128xf32>
    tpu.vector_store %arg12[%c0_79, %c0_80], %131 {strides = array<i32>} : memref<32x128xf32, #tpu.memory_space<vmem>>, vector<32x128xf32>,
    return
  }
}

</mosaic_0001>

<llo_original>
// kernel: basic_block_forward.1
$region0: #{basic_block_forward.1}
  #allocation0 [shape = 'u32[]', space=smem, size = 0x4, offset = 0x4, fixed_abs, tag = 'smem constant byte address 0x4 - core index']
  #allocation1 [shape = 'u32[144,128]{1,0:T(1,128)}', space=vmem, size = 0x12000, scoped, tag = 'internal scratch']
  %s0 = inlined_call_operand.vmem [shape: f32[32,64], index: 0, kind: input, shape index: {}]
  %s1 = inlined_call_operand.vmem [shape: f32[1,4], index: 1, kind: input, shape index: {}]
  %s2 = inlined_call_operand.vmem [shape: f32[1,4], index: 2, kind: input, shape index: {}]
  %s3 = inlined_call_operand.vmem [shape: f32[192,128], index: 3, kind: input, shape index: {}]
  %s4 = inlined_call_operand.vmem [shape: f32[1,8], index: 4, kind: input, shape index: {}]
  %s5 = inlined_call_operand.vmem [shape: f32[1,8], index: 5, kind: input, shape index: {}]
  %s6 = inlined_call_operand.vmem [shape: f32[384,128], index: 6, kind: input, shape index: {}]
  %s7 = inlined_call_operand.vmem [shape: f32[64,128], index: 7, kind: input, shape index: {}]
  %s8 = inlined_call_operand.vmem [shape: f32[64,4], index: 8, kind: input, shape index: {}]
  %s9 = inlined_call_operand.vmem [shape: f32[4,64], index: 9, kind: input, shape index: {}]
  %s10 = inlined_call_operand.vmem [shape: f32[128,8], index: 10, kind: input, shape index: {}]
  %s11 = inlined_call_operand.vmem [shape: f32[8,128], index: 11, kind: input, shape index: {}]
  %s12 = inlined_call_operand.vmem [shape: f32[32,128], index: 12, kind: output, shape index: {}]
  %s13 = sld [smem:[#allocation0]]
  $region58: #{basic_block_forward.1} parent=0
    _
  %s15 = ssub.s32 1, %s13
  %s16 = scalar_select 0, %s15, %s13
  // Predicated region
  $region2: #{basic_block_forward.1} parent=0 // pred_check
    _
  $region3: #{basic_block_forward.1} parent=0 // pred_check_branch
    %18 = sbr.rel (0) target = $region5
  $region4: #{basic_block_forward.1} parent=0 // pred_region
    _
  $region5: #{basic_block_forward.1} parent=0 // pred_fallthru
    _
  // Predicated region
  $region6: #{basic_block_forward.1} parent=0 // pred_check
    _
  $region7: #{basic_block_forward.1} parent=0 // pred_check_branch
    %20 = sbr.rel (0) target = $region9
  $region8: #{basic_block_forward.1} parent=0 // pred_region
    _
  $region9: #{basic_block_forward.1} parent=0 // pred_fallthru
    _
  // Predicated region
  $region10: #{basic_block_forward.1} parent=0 // pred_check
    _
  $region11: #{basic_block_forward.1} parent=0 // pred_check_branch
    %22 = sbr.rel (0) target = $region13
  $region12: #{basic_block_forward.1} parent=0 // pred_region
    _
  $region13: #{basic_block_forward.1} parent=0 // pred_fallthru
    _
  // Predicated region
  $region14: #{basic_block_forward.1} parent=0 // pred_check
    _
  $region15: #{basic_block_forward.1} parent=0 // pred_check_branch
    %24 = sbr.rel (0) target = $region17
  $region16: #{basic_block_forward.1} parent=0 // pred_region
    _
  $region17: #{basic_block_forward.1} parent=0 // pred_fallthru
    _
  // Predicated region
  $region18: #{basic_block_forward.1} parent=0 // pred_check
    _
  $region19: #{basic_block_forward.1} parent=0 // pred_check_branch
    %26 = sbr.rel (0) target = $region21
  $region20: #{basic_block_forward.1} parent=0 // pred_region
    _
  $region21: #{basic_block_forward.1} parent=0 // pred_fallthru
    _
  // Predicated region
  $region22: #{basic_block_forward.1} parent=0 // pred_check
    _
  $region23: #{basic_block_forward.1} parent=0 // pred_check_branch
    %28 = sbr.rel (0) target = $region25
  $region24: #{basic_block_forward.1} parent=0 // pred_region
    _
  $region25: #{basic_block_forward.1} parent=0 // pred_fallthru
    _
  // Predicated region
  $region26: #{basic_block_forward.1} parent=0 // pred_check
    _
  $region27: #{basic_block_forward.1} parent=0 // pred_check_branch
    %30 = sbr.rel (0) target = $region29
  $region28: #{basic_block_forward.1} parent=0 // pred_region
    _
  $region29: #{basic_block_forward.1} parent=0 // pred_fallthru
    _
  // Predicated region
  $region30: #{basic_block_forward.1} parent=0 // pred_check
    _
  $region31: #{basic_block_forward.1} parent=0 // pred_check_branch
    %32 = sbr.rel (0) target = $region33
  $region32: #{basic_block_forward.1} parent=0 // pred_region
    _
  $region33: #{basic_block_forward.1} parent=0 // pred_fallthru
    _
  // Predicated region
  $region34: #{basic_block_forward.1} parent=0 // pred_check
    _
  $region35: #{basic_block_forward.1} parent=0 // pred_check_branch
    %34 = sbr.rel (0) target = $region37
  $region36: #{basic_block_forward.1} parent=0 // pred_region
    _
  $region37: #{basic_block_forward.1} parent=0 // pred_fallthru
    _
  // Predicated region
  $region38: #{basic_block_forward.1} parent=0 // pred_check
    _
  $region39: #{basic_block_forward.1} parent=0 // pred_check_branch
    %36 = sbr.rel (0) target = $region41
  $region40: #{basic_block_forward.1} parent=0 // pred_region
    _
  $region41: #{basic_block_forward.1} parent=0 // pred_fallthru
    _
  // Predicated region
  $region42: #{basic_block_forward.1} parent=0 // pred_check
    _
  $region43: #{basic_block_forward.1} parent=0 // pred_check_branch
    %38 = sbr.rel (0) target = $region45
  $region44: #{basic_block_forward.1} parent=0 // pred_region
    _
  $region45: #{basic_block_forward.1} parent=0 // pred_fallthru
    _
  // Predicated region
  $region46: #{basic_block_forward.1} parent=0 // pred_check
    _
  $region47: #{basic_block_forward.1} parent=0 // pred_check_branch
    %40 = sbr.rel (0) target = $region49
  $region48: #{basic_block_forward.1} parent=0 // pred_region
    _
  $region49: #{basic_block_forward.1} parent=0 // pred_fallthru
    _
  %v41 = vld [vmem:[%s0] sm:$0xff]
  %v42 = vld [vmem:[%s0 + $0x8] sm:$0xff]
  %v43 = vld [vmem:[%s0 + $0x10] sm:$0xff]
  %v44 = vld [vmem:[%s0 + $0x18] sm:$0xff]
  %v45 = vld [vmem:[%s8] sm:$0xff]
  %v46 = vld [vmem:[%s8 + $0x8] sm:$0xff]
  %v47 = vld [vmem:[%s8 + $0x10] sm:$0xff]
  %v48 = vld [vmem:[%s8 + $0x18] sm:$0xff]
  %v49 = vld [vmem:[%s8 + $0x20] sm:$0xff]
  %v50 = vld [vmem:[%s8 + $0x28] sm:$0xff]
  %v51 = vld [vmem:[%s8 + $0x30] sm:$0xff]
  %v52 = vld [vmem:[%s8 + $0x38] sm:$0xff]
  %vm53 = vcmask 523264
  %v55 = vsel %vm53, %v41, 0
  %v58 = vsel %vm53, %v42, 0
  %v61 = vsel %vm53, %v43, 0
  %v64 = vsel %vm53, %v44, 0
  %66 = vmatprep.subr.mxu0 0.0
  %67 = vmatpush1.msra.mxu0 %v45
  %68 = vmatprep.subr.mxu0 0.0
  %69 = vmatpush1.msra.mxu0 %v46
  %70 = vmatprep.subr.mxu0 0.0
  %71 = vmatpush1.msra.mxu0 %v47
  %72 = vmatprep.subr.mxu0 0.0
  %73 = vmatpush1.msra.mxu0 %v48
  %74 = vmatprep.subr.mxu0 0.0
  %75 = vmatpush1.msra.mxu0 %v49
  %76 = vmatprep.subr.mxu0 0.0
  %77 = vmatpush1.msra.mxu0 %v50
  %78 = vmatprep.subr.mxu0 0.0
  %79 = vmatpush1.msra.mxu0 %v51
  %80 = vmatprep.subr.mxu0 0.0
  %81 = vmatpush1.msra.mxu0 %v52
  %82 = vmatprep.subr.mxu0 0.0
  %83 = vmatpush1.msra.mxu0 0.0
  %84 = vmatprep.subr.mxu0 0.0
  %85 = vmatpush1.msra.mxu0 0.0
  %86 = vmatprep.subr.mxu0 0.0
  %87 = vmatpush1.msra.mxu0 0.0
  %88 = vmatprep.subr.mxu0 0.0
  %89 = vmatpush1.msra.mxu0 0.0
  %90 = vmatprep.subr.mxu0 0.0
  %91 = vmatpush1.msra.mxu0 0.0
  %92 = vmatprep.subr.mxu0 0.0
  %93 = vmatpush1.msra.mxu0 0.0
  %94 = vmatprep.subr.mxu0 0.0
  %95 = vmatpush1.msra.mxu0 0.0
  %96 = vmatprep.subr.mxu0 0.0
  %97 = vmatpush1.msra.mxu0 0.0
  %98 = vmatprep.subr.mxu0 0.0
  %99 = vmatpush1.msra.mxu0 0.0
  %100 = vmatprep.subr.mxu0 0.0
  %101 = vmatpush1.msra.mxu0 0.0
  %102 = vmatprep.subr.mxu0 0.0
  %103 = vmatpush1.msra.mxu0 0.0
  %104 = vmatprep.subr.mxu0 0.0
  %105 = vmatpush1.msra.mxu0 0.0
  %106 = vmatprep.subr.mxu0 0.0
  %107 = vmatpush1.msra.mxu0 0.0
  %108 = vmatprep.subr.mxu0 0.0
  %109 = vmatpush1.msra.mxu0 0.0
  %110 = vmatprep.subr.mxu0 0.0
  %111 = vmatpush1.msra.mxu0 0.0
  %112 = vmatprep.subr.mxu0 0.0
  %113 = vmatpush1.msra.mxu0 0.0
  %114 = vmatprep.subr.mxu0 0.0
  %115 = vmatpush1.msra.mxu0 0.0
  %116 = vmatprep.subr.mxu0 0.0
  %117 = vmatpush1.msra.mxu0 0.0
  %118 = vmatprep.subr.mxu0 0.0
  %119 = vmatpush1.msra.mxu0 0.0
  %120 = vmatprep.subr.mxu0 0.0
  %121 = vmatpush1.msra.mxu0 0.0
  %122 = vmatprep.subr.mxu0 0.0
  %123 = vmatpush1.msra.mxu0 0.0
  %124 = vmatprep.subr.mxu0 0.0
  %125 = vmatpush1.msra.mxu0 0.0
  %126 = vmatprep.subr.mxu0 0.0
  %127 = vmatpush1.msra.mxu0 0.0
  %128 = vmatprep.subr.mxu0 0.0
  %129 = vmatpush1.msra.mxu0 0.0
  %130 = vmatprep.mubr.f32.mxu0 0.0
  %131 = vmatmul.mubr.f32.gmra.mrb[0].mxu0 %v55
  %v132 = vpop.f32.mrb[0].mxu0
  %v133 = vadd.f32 0.0, %v132
  %v134 = vpop.f32.mrb[0].mxu0
  %135 = vmatprep.mubr.f32.mxu0 0.0
  %136 = vmatmul.mubr.f32.gmra.mrb[0].mxu0 %v58
  %v137 = vpop.f32.mrb[0].mxu0
  %v138 = vadd.f32 0.0, %v137
  %v139 = vpop.f32.mrb[0].mxu0
  %140 = vmatprep.mubr.f32.mxu0 0.0
  %141 = vmatmul.mubr.f32.gmra.mrb[0].mxu0 %v61
  %v142 = vpop.f32.mrb[0].mxu0
  %v143 = vadd.f32 0.0, %v142
  %v144 = vpop.f32.mrb[0].mxu0
  %145 = vmatprep.mubr.f32.mxu0 0.0
  %146 = vmatmul.mubr.f32.gmra.mrb[0].mxu0 %v64
  %v147 = vpop.f32.mrb[0].mxu0
  %v148 = vadd.f32 0.0, %v147
  %v149 = vpop.f32.mrb[0].mxu0
  %150 = vdwg.mxu0
  %vm151 = vcmask 31744
  %v152 = vsel %vm151, %v133, 0.0
  %v153 = vsel %vm151, %v138, 0.0
  %v154 = vadd.f32 %v152, %v153
  %v155 = vsel %vm151, %v143, 0.0
  %v156 = vadd.f32 %v154, %v155
  %v157 = vsel %vm151, %v148, 0.0
  %v158 = vadd.f32 %v156, %v157
  %v159 = vrot.slane %v158, 4
  %v160 = vadd.f32 %v158, %v159
  %v161 = vrot.slane %v160, 2
  %v162 = vadd.f32 %v160, %v161
  %v163 = vrot.slane %v162, 1
  %v164 = vadd.f32 %v162, %v163
  %v165 = vmul.f32 %v164, 0.001953125
  %v166 = vld [vmem:[%s9] sm:$0xf]
  %v168 = vsel %vm151, %v165, 0
  %vm170 = vcmask 1043456
  %v172 = vsel %vm170, %v166, 0
  %174 = vmatprep.subr.mxu0 0.0
  %175 = vmatpush1.msra.mxu0 %v172
  %176 = vmatprep.subr.mxu0 0.0
  %177 = vmatpush1.msra.mxu0 0.0
  %178 = vmatprep.subr.mxu0 0.0
  %179 = vmatpush1.msra.mxu0 0.0
  %180 = vmatprep.subr.mxu0 0.0
  %181 = vmatpush1.msra.mxu0 0.0
  %182 = vmatprep.subr.mxu0 0.0
  %183 = vmatpush1.msra.mxu0 0.0
  %184 = vmatprep.subr.mxu0 0.0
  %185 = vmatpush1.msra.mxu0 0.0
  %186 = vmatprep.subr.mxu0 0.0
  %187 = vmatpush1.msra.mxu0 0.0
  %188 = vmatprep.subr.mxu0 0.0
  %189 = vmatpush1.msra.mxu0 0.0
  %190 = vmatprep.subr.mxu0 0.0
  %191 = vmatpush1.msra.mxu0 0.0
  %192 = vmatprep.subr.mxu0 0.0
  %193 = vmatpush1.msra.mxu0 0.0
  %194 = vmatprep.subr.mxu0 0.0
  %195 = vmatpush1.msra.mxu0 0.0
  %196 = vmatprep.subr.mxu0 0.0
  %197 = vmatpush1.msra.mxu0 0.0
  %198 = vmatprep.subr.mxu0 0.0
  %199 = vmatpush1.msra.mxu0 0.0
  %200 = vmatprep.subr.mxu0 0.0
  %201 = vmatpush1.msra.mxu0 0.0
  %202 = vmatprep.subr.mxu0 0.0
  %203 = vmatpush1.msra.mxu0 0.0
  %204 = vmatprep.subr.mxu0 0.0
  %205 = vmatpush1.msra.mxu0 0.0
  %206 = vmatprep.subr.mxu0 0.0
  %207 = vmatpush1.msra.mxu0 0.0
  %208 = vmatprep.subr.mxu0 0.0
  %209 = vmatpush1.msra.mxu0 0.0
  %210 = vmatprep.subr.mxu0 0.0
  %211 = vmatpush1.msra.mxu0 0.0
  %212 = vmatprep.subr.mxu0 0.0
  %213 = vmatpush1.msra.mxu0 0.0
  %214 = vmatprep.subr.mxu0 0.0
  %215 = vmatpush1.msra.mxu0 0.0
  %216 = vmatprep.subr.mxu0 0.0
  %217 = vmatpush1.msra.mxu0 0.0
  %218 = vmatprep.subr.mxu0 0.0
  %219 = vmatpush1.msra.mxu0 0.0
  %220 = vmatprep.subr.mxu0 0.0
  %221 = vmatpush1.msra.mxu0 0.0
  %222 = vmatprep.subr.mxu0 0.0
  %223 = vmatpush1.msra.mxu0 0.0
  %224 = vmatprep.subr.mxu0 0.0
  %225 = vmatpush1.msra.mxu0 0.0
  %226 = vmatprep.subr.mxu0 0.0
  %227 = vmatpush1.msra.mxu0 0.0
  %228 = vmatprep.subr.mxu0 0.0
  %229 = vmatpush1.msra.mxu0 0.0
  %230 = vmatprep.subr.mxu0 0.0
  %231 = vmatpush1.msra.mxu0 0.0
  %232 = vmatprep.subr.mxu0 0.0
  %233 = vmatpush1.msra.mxu0 0.0
  %234 = vmatprep.subr.mxu0 0.0
  %235 = vmatpush1.msra.mxu0 0.0
  %236 = vmatprep.subr.mxu0 0.0
  %237 = vmatpush1.msra.mxu0 0.0
  %238 = vmatprep.mubr.f32.mxu0 0.0
  %239 = vmatmul.mubr.f32.gmra.mrb[0].mxu0 %v168
  %v240 = vpop.f32.mrb[0].mxu0
  %v241 = vadd.f32 0.0, %v240
  %v242 = vpop.f32.mrb[0].mxu0
  %243 = vdwg.mxu0
  %v244 = vlaneseq
  %v245 = vshrl.u32 %v244, 7
  %v246 = vsub.s32 0, %v245
  %v247 = vrot.slane %v241, %v246
  %v248 = vsub.f32 %v41, %v247
  %v249 = vsub.f32 %v42, %v247
  %v250 = vsub.f32 %v43, %v247
  %v251 = vsub.f32 %v44, %v247
  %v252 = vmul.f32 %v248, %v248
  %v253 = vmul.f32 %v249, %v249
  %v254 = vmul.f32 %v250, %v250
  %v255 = vmul.f32 %v251, %v251
  %v257 = vsel %vm53, %v252, 0
  %v260 = vsel %vm53, %v253, 0
  %v263 = vsel %vm53, %v254, 0
  %v266 = vsel %vm53, %v255, 0
  %268 = vmatprep.subr.mxu0 0.0
  %269 = vmatpush1.msra.mxu0 %v45
  %270 = vmatprep.subr.mxu0 0.0
  %271 = vmatpush1.msra.mxu0 %v46
  %272 = vmatprep.subr.mxu0 0.0
  %273 = vmatpush1.msra.mxu0 %v47
  %274 = vmatprep.subr.mxu0 0.0
  %275 = vmatpush1.msra.mxu0 %v48
  %276 = vmatprep.subr.mxu0 0.0
  %277 = vmatpush1.msra.mxu0 %v49
  %278 = vmatprep.subr.mxu0 0.0
  %279 = vmatpush1.msra.mxu0 %v50
  %280 = vmatprep.subr.mxu0 0.0
  %281 = vmatpush1.msra.mxu0 %v51
  %282 = vmatprep.subr.mxu0 0.0
  %283 = vmatpush1.msra.mxu0 %v52
  %284 = vmatprep.subr.mxu0 0.0
  %285 = vmatpush1.msra.mxu0 0.0
  %286 = vmatprep.subr.mxu0 0.0
  %287 = vmatpush1.msra.mxu0 0.0
  %288 = vmatprep.subr.mxu0 0.0
  %289 = vmatpush1.msra.mxu0 0.0
  %290 = vmatprep.subr.mxu0 0.0
  %291 = vmatpush1.msra.mxu0 0.0
  %292 = vmatprep.subr.mxu0 0.0
  %293 = vmatpush1.msra.mxu0 0.0
  %294 = vmatprep.subr.mxu0 0.0
  %295 = vmatpush1.msra.mxu0 0.0
  %296 = vmatprep.subr.mxu0 0.0
  %297 = vmatpush1.msra.mxu0 0.0
  %298 = vmatprep.subr.mxu0 0.0
  %299 = vmatpush1.msra.mxu0 0.0
  %300 = vmatprep.subr.mxu0 0.0
  %301 = vmatpush1.msra.mxu0 0.0
  %302 = vmatprep.subr.mxu0 0.0
  %303 = vmatpush1.msra.mxu0 0.0
  %304 = vmatprep.subr.mxu0 0.0
  %305 = vmatpush1.msra.mxu0 0.0
  %306 = vmatprep.subr.mxu0 0.0
  %307 = vmatpush1.msra.mxu0 0.0
  %308 = vmatprep.subr.mxu0 0.0
  %309 = vmatpush1.msra.mxu0 0.0
  %310 = vmatprep.subr.mxu0 0.0
  %311 = vmatpush1.msra.mxu0 0.0
  %312 = vmatprep.subr.mxu0 0.0
  %313 = vmatpush1.msra.mxu0 0.0
  %314 = vmatprep.subr.mxu0 0.0
  %315 = vmatpush1.msra.mxu0 0.0
  %316 = vmatprep.subr.mxu0 0.0
  %317 = vmatpush1.msra.mxu0 0.0
  %318 = vmatprep.subr.mxu0 0.0
  %319 = vmatpush1.msra.mxu0 0.0
  %320 = vmatprep.subr.mxu0 0.0
  %321 = vmatpush1.msra.mxu0 0.0
  %322 = vmatprep.subr.mxu0 0.0
  %323 = vmatpush1.msra.mxu0 0.0
  %324 = vmatprep.subr.mxu0 0.0
  %325 = vmatpush1.msra.mxu0 0.0
  %326 = vmatprep.subr.mxu0 0.0
  %327 = vmatpush1.msra.mxu0 0.0
  %328 = vmatprep.subr.mxu0 0.0
  %329 = vmatpush1.msra.mxu0 0.0
  %330 = vmatprep.subr.mxu0 0.0
  %331 = vmatpush1.msra.mxu0 0.0
  %332 = vmatprep.mubr.f32.mxu0 0.0
  %333 = vmatmul.mubr.f32.gmra.mrb[0].mxu0 %v257
  %v334 = vpop.f32.mrb[0].mxu0
  %v335 = vadd.f32 0.0, %v334
  %v336 = vpop.f32.mrb[0].mxu0
  %337 = vmatprep.mubr.f32.mxu0 0.0
  %338 = vmatmul.mubr.f32.gmra.mrb[0].mxu0 %v260
  %v339 = vpop.f32.mrb[0].mxu0
  %v340 = vadd.f32 0.0, %v339
  %v341 = vpop.f32.mrb[0].mxu0
  %342 = vmatprep.mubr.f32.mxu0 0.0
  %343 = vmatmul.mubr.f32.gmra.mrb[0].mxu0 %v263
  %v344 = vpop.f32.mrb[0].mxu0
  %v345 = vadd.f32 0.0, %v344
  %v346 = vpop.f32.mrb[0].mxu0
  %347 = vmatprep.mubr.f32.mxu0 0.0
  %348 = vmatmul.mubr.f32.gmra.mrb[0].mxu0 %v266
  %v349 = vpop.f32.mrb[0].mxu0
  %v350 = vadd.f32 0.0, %v349
  %v351 = vpop.f32.mrb[0].mxu0
  %352 = vdwg.mxu0
  %v353 = vsel %vm151, %v335, 0.0
  %v354 = vsel %vm151, %v340, 0.0
  %v355 = vadd.f32 %v353, %v354
  %v356 = vsel %vm151, %v345, 0.0
  %v357 = vadd.f32 %v355, %v356
  %v358 = vsel %vm151, %v350, 0.0
  %v359 = vadd.f32 %v357, %v358
  %v360 = vrot.slane %v359, 4
  %v361 = vadd.f32 %v359, %v360
  %v362 = vrot.slane %v361, 2
  %v363 = vadd.f32 %v361, %v362
  %v364 = vrot.slane %v363, 1
  %v365 = vadd.f32 %v363, %v364
  %v366 = vmul.f32 %v365, 0.001953125
  %v367 = vld [vmem:[%s1] sm:$0x1]
  %v368 = vadd.f32 %v366, 1e-05
  %v369 = vrsqrt.pop %v368
  %v370 = vmul.f32 %v367, %v369
  %v372 = vsel %vm151, %v370, 0
  %374 = vmatprep.subr.mxu0 0.0
  %375 = vmatpush1.msra.mxu0 %v172
  %376 = vmatprep.subr.mxu0 0.0
  %377 = vmatpush1.msra.mxu0 0.0
  %378 = vmatprep.subr.mxu0 0.0
  %379 = vmatpush1.msra.mxu0 0.0
  %380 = vmatprep.subr.mxu0 0.0
  %381 = vmatpush1.msra.mxu0 0.0
  %382 = vmatprep.subr.mxu0 0.0
  %383 = vmatpush1.msra.mxu0 0.0
  %384 = vmatprep.subr.mxu0 0.0
  %385 = vmatpush1.msra.mxu0 0.0
  %386 = vmatprep.subr.mxu0 0.0
  %387 = vmatpush1.msra.mxu0 0.0
  %388 = vmatprep.subr.mxu0 0.0
  %389 = vmatpush1.msra.mxu0 0.0
  %390 = vmatprep.subr.mxu0 0.0
  %391 = vmatpush1.msra.mxu0 0.0
  %392 = vmatprep.subr.mxu0 0.0
  %393 = vmatpush1.msra.mxu0 0.0
  %394 = vmatprep.subr.mxu0 0.0
  %395 = vmatpush1.msra.mxu0 0.0
  %396 = vmatprep.subr.mxu0 0.0
  %397 = vmatpush1.msra.mxu0 0.0
  %398 = vmatprep.subr.mxu0 0.0
  %399 = vmatpush1.msra.mxu0 0.0
  %400 = vmatprep.subr.mxu0 0.0
  %401 = vmatpush1.msra.mxu0 0.0
  %402 = vmatprep.subr.mxu0 0.0
  %403 = vmatpush1.msra.mxu0 0.0
  %404 = vmatprep.subr.mxu0 0.0
  %405 = vmatpush1.msra.mxu0 0.0
  %406 = vmatprep.subr.mxu0 0.0
  %407 = vmatpush1.msra.mxu0 0.0
  %408 = vmatprep.subr.mxu0 0.0
  %409 = vmatpush1.msra.mxu0 0.0
  %410 = vmatprep.subr.mxu0 0.0
  %411 = vmatpush1.msra.mxu0 0.0
  %412 = vmatprep.subr.mxu0 0.0
  %413 = vmatpush1.msra.mxu0 0.0
  %414 = vmatprep.subr.mxu0 0.0
  %415 = vmatpush1.msra.mxu0 0.0
  %416 = vmatprep.subr.mxu0 0.0
  %417 = vmatpush1.msra.mxu0 0.0
  %418 = vmatprep.subr.mxu0 0.0
  %419 = vmatpush1.msra.mxu0 0.0
  %420 = vmatprep.subr.mxu0 0.0
  %421 = vmatpush1.msra.mxu0 0.0
  %422 = vmatprep.subr.mxu0 0.0
  %423 = vmatpush1.msra.mxu0 0.0
  %424 = vmatprep.subr.mxu0 0.0
  %425 = vmatpush1.msra.mxu0 0.0
  %426 = vmatprep.subr.mxu0 0.0
  %427 = vmatpush1.msra.mxu0 0.0
  %428 = vmatprep.subr.mxu0 0.0
  %429 = vmatpush1.msra.mxu0 0.0
  %430 = vmatprep.subr.mxu0 0.0
  %431 = vmatpush1.msra.mxu0 0.0
  %432 = vmatprep.subr.mxu0 0.0
  %433 = vmatpush1.msra.mxu0 0.0
  %434 = vmatprep.subr.mxu0 0.0
  %435 = vmatpush1.msra.mxu0 0.0
  %436 = vmatprep.subr.mxu0 0.0
  %437 = vmatpush1.msra.mxu0 0.0
  %438 = vmatprep.mubr.f32.mxu0 0.0
  %439 = vmatmul.mubr.f32.gmra.mrb[0].mxu0 %v372
  %v440 = vpop.f32.mrb[0].mxu0
  %v441 = vadd.f32 0.0, %v440
  %v442 = vpop.f32.mrb[0].mxu0
  %443 = vdwg.mxu0
  %v444 = vld [vmem:[%s2] sm:$0x1]
  %v446 = vsel %vm151, %v444, 0
  %448 = vmatprep.subr.mxu0 0.0
  %449 = vmatpush1.msra.mxu0 %v172
  %450 = vmatprep.subr.mxu0 0.0
  %451 = vmatpush1.msra.mxu0 0.0
  %452 = vmatprep.subr.mxu0 0.0
  %453 = vmatpush1.msra.mxu0 0.0
  %454 = vmatprep.subr.mxu0 0.0
  %455 = vmatpush1.msra.mxu0 0.0
  %456 = vmatprep.subr.mxu0 0.0
  %457 = vmatpush1.msra.mxu0 0.0
  %458 = vmatprep.subr.mxu0 0.0
  %459 = vmatpush1.msra.mxu0 0.0
  %460 = vmatprep.subr.mxu0 0.0
  %461 = vmatpush1.msra.mxu0 0.0
  %462 = vmatprep.subr.mxu0 0.0
  %463 = vmatpush1.msra.mxu0 0.0
  %464 = vmatprep.subr.mxu0 0.0
  %465 = vmatpush1.msra.mxu0 0.0
  %466 = vmatprep.subr.mxu0 0.0
  %467 = vmatpush1.msra.mxu0 0.0
  %468 = vmatprep.subr.mxu0 0.0
  %469 = vmatpush1.msra.mxu0 0.0
  %470 = vmatprep.subr.mxu0 0.0
  %471 = vmatpush1.msra.mxu0 0.0
  %472 = vmatprep.subr.mxu0 0.0
  %473 = vmatpush1.msra.mxu0 0.0
  %474 = vmatprep.subr.mxu0 0.0
  %475 = vmatpush1.msra.mxu0 0.0
  %476 = vmatprep.subr.mxu0 0.0
  %477 = vmatpush1.msra.mxu0 0.0
  %478 = vmatprep.subr.mxu0 0.0
  %479 = vmatpush1.msra.mxu0 0.0
  %480 = vmatprep.subr.mxu0 0.0
  %481 = vmatpush1.msra.mxu0 0.0
  %482 = vmatprep.subr.mxu0 0.0
  %483 = vmatpush1.msra.mxu0 0.0
  %484 = vmatprep.subr.mxu0 0.0
  %485 = vmatpush1.msra.mxu0 0.0
  %486 = vmatprep.subr.mxu0 0.0
  %487 = vmatpush1.msra.mxu0 0.0
  %488 = vmatprep.subr.mxu0 0.0
  %489 = vmatpush1.msra.mxu0 0.0
  %490 = vmatprep.subr.mxu0 0.0
  %491 = vmatpush1.msra.mxu0 0.0
  %492 = vmatprep.subr.mxu0 0.0
  %493 = vmatpush1.msra.mxu0 0.0
  %494 = vmatprep.subr.mxu0 0.0
  %495 = vmatpush1.msra.mxu0 0.0
  %496 = vmatprep.subr.mxu0 0.0
  %497 = vmatpush1.msra.mxu0 0.0
  %498 = vmatprep.subr.mxu0 0.0
  %499 = vmatpush1.msra.mxu0 0.0
  %500 = vmatprep.subr.mxu0 0.0
  %501 = vmatpush1.msra.mxu0 0.0
  %502 = vmatprep.subr.mxu0 0.0
  %503 = vmatpush1.msra.mxu0 0.0
  %504 = vmatprep.subr.mxu0 0.0
  %505 = vmatpush1.msra.mxu0 0.0
  %506 = vmatprep.subr.mxu0 0.0
  %507 = vmatpush1.msra.mxu0 0.0
  %508 = vmatprep.subr.mxu0 0.0
  %509 = vmatpush1.msra.mxu0 0.0
  %510 = vmatprep.subr.mxu0 0.0
  %511 = vmatpush1.msra.mxu0 0.0
  %512 = vmatprep.mubr.f32.mxu0 0.0
  %513 = vmatmul.mubr.f32.gmra.mrb[0].mxu0 %v446
  %v514 = vpop.f32.mrb[0].mxu0
  %v515 = vadd.f32 0.0, %v514
  %v516 = vpop.f32.mrb[0].mxu0
  %517 = vdwg.mxu0
  %v518 = vlaneseq
  %v519 = vshrl.u32 %v518, 7
  %v520 = vsub.s32 0, %v519
  %v521 = vrot.slane %v441, %v520
  %v522 = vmul.f32 %v248, %v521
  %v523 = vmul.f32 %v249, %v521
  %v524 = vmul.f32 %v250, %v521
  %v525 = vmul.f32 %v251, %v521
  %v526 = vlaneseq
  %v527 = vshrl.u32 %v526, 7
  %v528 = vsub.s32 0, %v527
  %v529 = vrot.slane %v515, %v528
  %v530 = vadd.f32 %v522, %v529
  %v531 = vadd.f32 %v523, %v529
  %v532 = vadd.f32 %v524, %v529
  %v533 = vadd.f32 %v525, %v529
  %v534 = vmax.f32 %v530, 0.0
  %v535 = vmax.f32 %v531, 0.0
  %v536 = vmax.f32 %v532, 0.0
  %v537 = vmax.f32 %v533, 0.0
  %v538 = vld [vmem:[%s7] sm:$0xff]
  %v539 = vld [vmem:[%s7 + $0x8] sm:$0xff]
  %v540 = vld [vmem:[%s7 + $0x10] sm:$0xff]
  %v541 = vld [vmem:[%s7 + $0x18] sm:$0xff]
  %v542 = vld [vmem:[%s7 + $0x20] sm:$0xff]
  %v543 = vld [vmem:[%s7 + $0x28] sm:$0xff]
  %v544 = vld [vmem:[%s7 + $0x30] sm:$0xff]
  %v545 = vld [vmem:[%s7 + $0x38] sm:$0xff]
  %v547 = vsel %vm53, %v534, 0
  %v550 = vsel %vm53, %v535, 0
  %v553 = vsel %vm53, %v536, 0
  %v556 = vsel %vm53, %v537, 0
  %558 = vmatprep.subr.mxu0 0.0
  %559 = vmatpush1.msra.mxu0 %v538
  %560 = vmatprep.subr.mxu0 0.0
  %561 = vmatpush1.msra.mxu0 %v539
  %562 = vmatprep.subr.mxu0 0.0
  %563 = vmatpush1.msra.mxu0 %v540
  %564 = vmatprep.subr.mxu0 0.0
  %565 = vmatpush1.msra.mxu0 %v541
  %566 = vmatprep.subr.mxu0 0.0
  %567 = vmatpush1.msra.mxu0 %v542
  %568 = vmatprep.subr.mxu0 0.0
  %569 = vmatpush1.msra.mxu0 %v543
  %570 = vmatprep.subr.mxu0 0.0
  %571 = vmatpush1.msra.mxu0 %v544
  %572 = vmatprep.subr.mxu0 0.0
  %573 = vmatpush1.msra.mxu0 %v545
  %574 = vmatprep.subr.mxu0 0.0
  %575 = vmatpush1.msra.mxu0 0.0
  %576 = vmatprep.subr.mxu0 0.0
  %577 = vmatpush1.msra.mxu0 0.0
  %578 = vmatprep.subr.mxu0 0.0
  %579 = vmatpush1.msra.mxu0 0.0
  %580 = vmatprep.subr.mxu0 0.0
  %581 = vmatpush1.msra.mxu0 0.0
  %582 = vmatprep.subr.mxu0 0.0
  %583 = vmatpush1.msra.mxu0 0.0
  %584 = vmatprep.subr.mxu0 0.0
  %585 = vmatpush1.msra.mxu0 0.0
  %586 = vmatprep.subr.mxu0 0.0
  %587 = vmatpush1.msra.mxu0 0.0
  %588 = vmatprep.subr.mxu0 0.0
  %589 = vmatpush1.msra.mxu0 0.0
  %590 = vmatprep.subr.mxu0 0.0
  %591 = vmatpush1.msra.mxu0 0.0
  %592 = vmatprep.subr.mxu0 0.0
  %593 = vmatpush1.msra.mxu0 0.0
  %594 = vmatprep.subr.mxu0 0.0
  %595 = vmatpush1.msra.mxu0 0.0
  %596 = vmatprep.subr.mxu0 0.0
  %597 = vmatpush1.msra.mxu0 0.0
  %598 = vmatprep.subr.mxu0 0.0
  %599 = vmatpush1.msra.mxu0 0.0
  %600 = vmatprep.subr.mxu0 0.0
  %601 = vmatpush1.msra.mxu0 0.0
  %602 = vmatprep.subr.mxu0 0.0
  %603 = vmatpush1.msra.mxu0 0.0
  %604 = vmatprep.subr.mxu0 0.0
  %605 = vmatpush1.msra.mxu0 0.0
  %606 = vmatprep.subr.mxu0 0.0
  %607 = vmatpush1.msra.mxu0 0.0
  %608 = vmatprep.subr.mxu0 0.0
  %609 = vmatpush1.msra.mxu0 0.0
  %610 = vmatprep.subr.mxu0 0.0
  %611 = vmatpush1.msra.mxu0 0.0
  %612 = vmatprep.subr.mxu0 0.0
  %613 = vmatpush1.msra.mxu0 0.0
  %614 = vmatprep.subr.mxu0 0.0
  %615 = vmatpush1.msra.mxu0 0.0
  %616 = vmatprep.subr.mxu0 0.0
  %617 = vmatpush1.msra.mxu0 0.0
  %618 = vmatprep.subr.mxu0 0.0
  %619 = vmatpush1.msra.mxu0 0.0
  %620 = vmatprep.subr.mxu0 0.0
  %621 = vmatpush1.msra.mxu0 0.0
  %622 = vmatprep.mubr.f32.mxu0 0.0
  %623 = vmatmul.mubr.f32.gmra.mrb[0].mxu0 %v547
  %v624 = vpop.f32.mrb[0].mxu0
  %v625 = vadd.f32 0.0, %v624
  %v626 = vpop.f32.mrb[0].mxu0
  %627 = vmatprep.mubr.f32.mxu0 0.0
  %628 = vmatmul.mubr.f32.gmra.mrb[0].mxu0 %v550
  %v629 = vpop.f32.mrb[0].mxu0
  %v630 = vadd.f32 0.0, %v629
  %v631 = vpop.f32.mrb[0].mxu0
  %632 = vmatprep.mubr.f32.mxu0 0.0
  %633 = vmatmul.mubr.f32.gmra.mrb[0].mxu0 %v553
  %v634 = vpop.f32.mrb[0].mxu0
  %v635 = vadd.f32 0.0, %v634
  %v636 = vpop.f32.mrb[0].mxu0
  %637 = vmatprep.mubr.f32.mxu0 0.0
  %638 = vmatmul.mubr.f32.gmra.mrb[0].mxu0 %v556
  %v639 = vpop.f32.mrb[0].mxu0
  %v640 = vadd.f32 0.0, %v639
  %v641 = vpop.f32.mrb[0].mxu0
  %642 = vdwg.mxu0
  %v643 = vlaneseq
  %v644 = vshrl.u32 %v643, 7
  %v645 = vadd.s32 %v644, 8
  %v646 = vadd.s32 %v644, 16
  %v647 = vadd.s32 %v644, 24
  %vm648 = vcmp.lt.s32.totalorder %v644, 0
  %v649 = vsub.s32 0, %v644
  %v650 = vsel %vm648, %v649, %v644
  %v651 = vshrl.u32 %v650, 4
  %v652 = vand.u32 %v650, 15
  %v653 = vsub.s32 0, %v652
  %v654 = vsel %vm648, %v653, %v652
  %vm655 = vcmp.lt.s32.totalorder %v645, 0
  %v656 = vsub.s32 0, %v645
  %v657 = vsel %vm655, %v656, %v645
  %v658 = vshrl.u32 %v657, 4
  %v659 = vand.u32 %v657, 15
  %v660 = vsub.s32 0, %v659
  %v661 = vsel %vm655, %v660, %v659
  %vm662 = vcmp.lt.s32.totalorder %v646, 0
  %v663 = vsub.s32 0, %v646
  %v664 = vsel %vm662, %v663, %v646
  %v665 = vshrl.u32 %v664, 4
  %v666 = vand.u32 %v664, 15
  %v667 = vsub.s32 0, %v666
  %v668 = vsel %vm662, %v667, %v666
  %vm669 = vcmp.lt.s32.totalorder %v647, 0
  %v670 = vsub.s32 0, %v647
  %v671 = vsel %vm669, %v670, %v647
  %v672 = vshrl.u32 %v671, 4
  %v673 = vand.u32 %v671, 15
  %v674 = vsub.s32 0, %v673
  %v675 = vsel %vm669, %v674, %v673
  %vm676 = vcmp.ne.s32.totalorder %v654, 0
  %vm677 = vcmp.ne.s32.totalorder %v661, 0
  %vm678 = vcmp.ne.s32.totalorder %v668, 0
  %vm679 = vcmp.ne.s32.totalorder %v675, 0
  %vm680 = vcmp.lt.s32.totalorder %v654, 0
  %vm681 = vcmp.lt.s32.totalorder %v661, 0
  %vm682 = vcmp.lt.s32.totalorder %v668, 0
  %vm683 = vcmp.lt.s32.totalorder %v675, 0
  %vm684 = vmand %vm680, %vm676
  %vm685 = vmand %vm681, %vm677
  %vm686 = vmand %vm682, %vm678
  %vm687 = vmand %vm683, %vm679
  %v688 = vadd.s32 %v654, 16
  %v689 = vadd.s32 %v661, 16
  %v690 = vadd.s32 %v668, 16
  %v691 = vadd.s32 %v675, 16
  %v692 = vsel %vm684, %v688, %v654
  %v693 = vsel %vm685, %v689, %v661
  %v694 = vsel %vm686, %v690, %v668
  %v695 = vsel %vm687, %v691, %v675
  %vm696 = vcmp.eq.s32.totalorder %v692, 0
  %vm697 = vcmp.eq.s32.totalorder %v693, 0
  %vm698 = vcmp.eq.s32.totalorder %v694, 0
  %vm699 = vcmp.eq.s32.totalorder %v695, 0
  %v700 = vrot.slane %v534, 7
  %v701 = vrot.slane %v535, 7
  %v702 = vrot.slane %v536, 7
  %v703 = vrot.slane %v537, 7
  %vm704 = vcmp.lt.s32.totalorder %v644, 1
  %v705 = vsel %vm704, %v702, %v703
  %v706 = vsel %vm704, %v701, %v702
  %v707 = vsel %vm704, %v700, %v701
  %v708 = vsel %vm704, %v703, %v700
  %v709 = vsel %vm696, 0.0, %v708
  %v710 = vsel %vm697, 0.0, %v707
  %v711 = vsel %vm698, 0.0, %v706
  %v712 = vsel %vm699, 0.0, %v705
  %vm713 = vcmp.eq.s32.totalorder %v692, 15
  %vm714 = vcmp.eq.s32.totalorder %v693, 15
  %vm715 = vcmp.eq.s32.totalorder %v694, 15
  %vm716 = vcmp.eq.s32.totalorder %v695, 15
  %v717 = vrot.slane %v534, 1
  %v718 = vrot.slane %v535, 1
  %v719 = vrot.slane %v536, 1
  %v720 = vrot.slane %v537, 1
  %vm721 = vcmp.lt.s32.totalorder %v644, 7
  %v722 = vsel %vm721, %v719, %v720
  %v723 = vsel %vm721, %v718, %v719
  %v724 = vsel %vm721, %v717, %v718
  %v725 = vsel %vm721, %v720, %v717
  %v726 = vsel %vm713, 0.0, %v724
  %v727 = vsel %vm714, 0.0, %v723
  %v728 = vsel %vm715, 0.0, %v722
  %v729 = vsel %vm716, 0.0, %v725
  %730 = vrot.lane.b32.xlu0 %v534, 64
  %v731 = vpop.permute.xlu0 %730
  %732 = vrot.lane.b32.xlu0 %v535, 64
  %v733 = vpop.permute.xlu0 %732
  %734 = vrot.lane.b32.xlu0 %v536, 64
  %v735 = vpop.permute.xlu0 %734
  %736 = vrot.lane.b32.xlu0 %v537, 64
  %v737 = vpop.permute.xlu0 %736
  %v742 = vsel %vm53, %v709, %v731
  %v743 = vsel %vm53, %v710, %v733
  %v744 = vsel %vm53, %v711, %v735
  %v745 = vsel %vm53, %v712, %v737
  %v746 = vld [vmem:[%s3] sm:$0xff]
  %v747 = vld [vmem:[%s3 + $0x8] sm:$0xff]
  %v748 = vld [vmem:[%s3 + $0x10] sm:$0xff]
  %v749 = vld [vmem:[%s3 + $0x18] sm:$0xff]
  %v750 = vld [vmem:[%s3 + $0x20] sm:$0xff]
  %v751 = vld [vmem:[%s3 + $0x28] sm:$0xff]
  %v752 = vld [vmem:[%s3 + $0x30] sm:$0xff]
  %v753 = vld [vmem:[%s3 + $0x38] sm:$0xff]
  %v754 = vld [vmem:[%s3 + $0x40] sm:$0xff]
  %v755 = vld [vmem:[%s3 + $0x48] sm:$0xff]
  %v756 = vld [vmem:[%s3 + $0x50] sm:$0xff]
  %v757 = vld [vmem:[%s3 + $0x58] sm:$0xff]
  %v758 = vld [vmem:[%s3 + $0x60] sm:$0xff]
  %v759 = vld [vmem:[%s3 + $0x68] sm:$0xff]
  %v760 = vld [vmem:[%s3 + $0x70] sm:$0xff]
  %v761 = vld [vmem:[%s3 + $0x78] sm:$0xff]
  %v762 = vld [vmem:[%s3 + $0x80] sm:$0xff]
  %v763 = vld [vmem:[%s3 + $0x88] sm:$0xff]
  %v764 = vld [vmem:[%s3 + $0x90] sm:$0xff]
  %v765 = vld [vmem:[%s3 + $0x98] sm:$0xff]
  %v766 = vld [vmem:[%s3 + $0xa0] sm:$0xff]
  %v767 = vld [vmem:[%s3 + $0xa8] sm:$0xff]
  %v768 = vld [vmem:[%s3 + $0xb0] sm:$0xff]
  %v769 = vld [vmem:[%s3 + $0xb8] sm:$0xff]
  %v771 = vsel %vm53, %v726, 0
  %v774 = vsel %vm53, %v727, 0
  %v777 = vsel %vm53, %v728, 0
  %v780 = vsel %vm53, %v729, 0
  %782 = vmatprep.subr.mxu0 0.0
  %783 = vmatpush1.msra.mxu0 %v746
  %784 = vmatprep.subr.mxu0 0.0
  %785 = vmatpush1.msra.mxu0 %v747
  %786 = vmatprep.subr.mxu0 0.0
  %787 = vmatpush1.msra.mxu0 %v748
  %788 = vmatprep.subr.mxu0 0.0
  %789 = vmatpush1.msra.mxu0 %v749
  %790 = vmatprep.subr.mxu0 0.0
  %791 = vmatpush1.msra.mxu0 %v750
  %792 = vmatprep.subr.mxu0 0.0
  %793 = vmatpush1.msra.mxu0 %v751
  %794 = vmatprep.subr.mxu0 0.0
  %795 = vmatpush1.msra.mxu0 %v752
  %796 = vmatprep.subr.mxu0 0.0
  %797 = vmatpush1.msra.mxu0 %v753
  %798 = vmatprep.subr.mxu0 0.0
  %799 = vmatpush1.msra.mxu0 %v754
  %800 = vmatprep.subr.mxu0 0.0
  %801 = vmatpush1.msra.mxu0 %v755
  %802 = vmatprep.subr.mxu0 0.0
  %803 = vmatpush1.msra.mxu0 %v756
  %804 = vmatprep.subr.mxu0 0.0
  %805 = vmatpush1.msra.mxu0 %v757
  %806 = vmatprep.subr.mxu0 0.0
  %807 = vmatpush1.msra.mxu0 %v758
  %808 = vmatprep.subr.mxu0 0.0
  %809 = vmatpush1.msra.mxu0 %v759
  %810 = vmatprep.subr.mxu0 0.0
  %811 = vmatpush1.msra.mxu0 %v760
  %812 = vmatprep.subr.mxu0 0.0
  %813 = vmatpush1.msra.mxu0 %v761
  %814 = vmatprep.subr.mxu0 0.0
  %815 = vmatpush1.msra.mxu0 %v762
  %816 = vmatprep.subr.mxu0 0.0
  %817 = vmatpush1.msra.mxu0 %v763
  %818 = vmatprep.subr.mxu0 0.0
  %819 = vmatpush1.msra.mxu0 %v764
  %820 = vmatprep.subr.mxu0 0.0
  %821 = vmatpush1.msra.mxu0 %v765
  %822 = vmatprep.subr.mxu0 0.0
  %823 = vmatpush1.msra.mxu0 %v766
  %824 = vmatprep.subr.mxu0 0.0
  %825 = vmatpush1.msra.mxu0 %v767
  %826 = vmatprep.subr.mxu0 0.0
  %827 = vmatpush1.msra.mxu0 %v768
  %828 = vmatprep.subr.mxu0 0.0
  %829 = vmatpush1.msra.mxu0 %v769
  %830 = vmatprep.subr.mxu0 0.0
  %831 = vmatpush1.msra.mxu0 0.0
  %832 = vmatprep.subr.mxu0 0.0
  %833 = vmatpush1.msra.mxu0 0.0
  %834 = vmatprep.subr.mxu0 0.0
  %835 = vmatpush1.msra.mxu0 0.0
  %836 = vmatprep.subr.mxu0 0.0
  %837 = vmatpush1.msra.mxu0 0.0
  %838 = vmatprep.subr.mxu0 0.0
  %839 = vmatpush1.msra.mxu0 0.0
  %840 = vmatprep.subr.mxu0 0.0
  %841 = vmatpush1.msra.mxu0 0.0
  %842 = vmatprep.subr.mxu0 0.0
  %843 = vmatpush1.msra.mxu0 0.0
  %844 = vmatprep.subr.mxu0 0.0
  %845 = vmatpush1.msra.mxu0 0.0
  %846 = vmatprep.mubr.f32.mxu0 %v771
  %847 = vmatmul.mubr.f32.gmra.mrb[0].mxu0 %v742
  %v848 = vpop.f32.mrb[0].mxu0
  %v849 = vadd.f32 0.0, %v848
  %v850 = vpop.f32.mrb[0].mxu0
  %851 = vmatprep.mubr.f32.mxu0 %v774
  %852 = vmatmul.mubr.f32.gmra.mrb[0].mxu0 %v743
  %v853 = vpop.f32.mrb[0].mxu0
  %v854 = vadd.f32 0.0, %v853
  %v855 = vpop.f32.mrb[0].mxu0
  %856 = vmatprep.mubr.f32.mxu0 %v777
  %857 = vmatmul.mubr.f32.gmra.mrb[0].mxu0 %v744
  %v858 = vpop.f32.mrb[0].mxu0
  %v859 = vadd.f32 0.0, %v858
  %v860 = vpop.f32.mrb[0].mxu0
  %861 = vmatprep.mubr.f32.mxu0 %v780
  %862 = vmatmul.mubr.f32.gmra.mrb[0].mxu0 %v745
  %v863 = vpop.f32.mrb[0].mxu0
  %v864 = vadd.f32 0.0, %v863
  %v865 = vpop.f32.mrb[0].mxu0
  %866 = vdwg.mxu0
  %v867 = vld [vmem:[%s10] sm:$0xff]
  %v868 = vld [vmem:[%s10 + $0x8] sm:$0xff]
  %v869 = vld [vmem:[%s10 + $0x10] sm:$0xff]
  %v870 = vld [vmem:[%s10 + $0x18] sm:$0xff]
  %v871 = vld [vmem:[%s10 + $0x20] sm:$0xff]
  %v872 = vld [vmem:[%s10 + $0x28] sm:$0xff]
  %v873 = vld [vmem:[%s10 + $0x30] sm:$0xff]
  %v874 = vld [vmem:[%s10 + $0x38] sm:$0xff]
  %v875 = vld [vmem:[%s10 + $0x40] sm:$0xff]
  %v876 = vld [vmem:[%s10 + $0x48] sm:$0xff]
  %v877 = vld [vmem:[%s10 + $0x50] sm:$0xff]
  %v878 = vld [vmem:[%s10 + $0x58] sm:$0xff]
  %v879 = vld [vmem:[%s10 + $0x60] sm:$0xff]
  %v880 = vld [vmem:[%s10 + $0x68] sm:$0xff]
  %v881 = vld [vmem:[%s10 + $0x70] sm:$0xff]
  %v882 = vld [vmem:[%s10 + $0x78] sm:$0xff]
  %883 = vmatprep.subr.mxu0 0.0
  %884 = vmatpush1.msra.mxu0 %v867
  %885 = vmatprep.subr.mxu0 0.0
  %886 = vmatpush1.msra.mxu0 %v868
  %887 = vmatprep.subr.mxu0 0.0
  %888 = vmatpush1.msra.mxu0 %v869
  %889 = vmatprep.subr.mxu0 0.0
  %890 = vmatpush1.msra.mxu0 %v870
  %891 = vmatprep.subr.mxu0 0.0
  %892 = vmatpush1.msra.mxu0 %v871
  %893 = vmatprep.subr.mxu0 0.0
  %894 = vmatpush1.msra.mxu0 %v872
  %895 = vmatprep.subr.mxu0 0.0
  %896 = vmatpush1.msra.mxu0 %v873
  %897 = vmatprep.subr.mxu0 0.0
  %898 = vmatpush1.msra.mxu0 %v874
  %899 = vmatprep.subr.mxu0 0.0
  %900 = vmatpush1.msra.mxu0 %v875
  %901 = vmatprep.subr.mxu0 0.0
  %902 = vmatpush1.msra.mxu0 %v876
  %903 = vmatprep.subr.mxu0 0.0
  %904 = vmatpush1.msra.mxu0 %v877
  %905 = vmatprep.subr.mxu0 0.0
  %906 = vmatpush1.msra.mxu0 %v878
  %907 = vmatprep.subr.mxu0 0.0
  %908 = vmatpush1.msra.mxu0 %v879
  %909 = vmatprep.subr.mxu0 0.0
  %910 = vmatpush1.msra.mxu0 %v880
  %911 = vmatprep.subr.mxu0 0.0
  %912 = vmatpush1.msra.mxu0 %v881
  %913 = vmatprep.subr.mxu0 0.0
  %914 = vmatpush1.msra.mxu0 %v882
  %915 = vmatprep.subr.mxu0 0.0
  %916 = vmatpush1.msra.mxu0 0.0
  %917 = vmatprep.subr.mxu0 0.0
  %918 = vmatpush1.msra.mxu0 0.0
  %919 = vmatprep.subr.mxu0 0.0
  %920 = vmatpush1.msra.mxu0 0.0
  %921 = vmatprep.subr.mxu0 0.0
  %922 = vmatpush1.msra.mxu0 0.0
  %923 = vmatprep.subr.mxu0 0.0
  %924 = vmatpush1.msra.mxu0 0.0
  %925 = vmatprep.subr.mxu0 0.0
  %926 = vmatpush1.msra.mxu0 0.0
  %927 = vmatprep.subr.mxu0 0.0
  %928 = vmatpush1.msra.mxu0 0.0
  %929 = vmatprep.subr.mxu0 0.0
  %930 = vmatpush1.msra.mxu0 0.0
  %931 = vmatprep.subr.mxu0 0.0
  %932 = vmatpush1.msra.mxu0 0.0
  %933 = vmatprep.subr.mxu0 0.0
  %934 = vmatpush1.msra.mxu0 0.0
  %935 = vmatprep.subr.mxu0 0.0
  %936 = vmatpush1.msra.mxu0 0.0
  %937 = vmatprep.subr.mxu0 0.0
  %938 = vmatpush1.msra.mxu0 0.0
  %939 = vmatprep.subr.mxu0 0.0
  %940 = vmatpush1.msra.mxu0 0.0
  %941 = vmatprep.subr.mxu0 0.0
  %942 = vmatpush1.msra.mxu0 0.0
  %943 = vmatprep.subr.mxu0 0.0
  %944 = vmatpush1.msra.mxu0 0.0
  %945 = vmatprep.subr.mxu0 0.0
  %946 = vmatpush1.msra.mxu0 0.0
  %947 = vmatprep.mubr.f32.mxu0 0.0
  %948 = vmatmul.mubr.f32.gmra.mrb[0].mxu0 %v849
  %v949 = vpop.f32.mrb[0].mxu0
  %v950 = vadd.f32 0.0, %v949
  %v951 = vpop.f32.mrb[0].mxu0
  %952 = vmatprep.mubr.f32.mxu0 0.0
  %953 = vmatmul.mubr.f32.gmra.mrb[0].mxu0 %v854
  %v954 = vpop.f32.mrb[0].mxu0
  %v955 = vadd.f32 0.0, %v954
  %v956 = vpop.f32.mrb[0].mxu0
  %957 = vmatprep.mubr.f32.mxu0 0.0
  %958 = vmatmul.mubr.f32.gmra.mrb[0].mxu0 %v859
  %v959 = vpop.f32.mrb[0].mxu0
  %v960 = vadd.f32 0.0, %v959
  %v961 = vpop.f32.mrb[0].mxu0
  %962 = vmatprep.mubr.f32.mxu0 0.0
  %963 = vmatmul.mubr.f32.gmra.mrb[0].mxu0 %v864
  %v964 = vpop.f32.mrb[0].mxu0
  %v965 = vadd.f32 0.0, %v964
  %v966 = vpop.f32.mrb[0].mxu0
  %967 = vdwg.mxu0
  %vm968 = vcmask 64512
  %v969 = vsel %vm968, %v950, 0.0
  %v970 = vsel %vm968, %v955, 0.0
  %v971 = vadd.f32 %v969, %v970
  %v972 = vsel %vm968, %v960, 0.0
  %v973 = vadd.f32 %v971, %v972
  %v974 = vsel %vm968, %v965, 0.0
  %v975 = vadd.f32 %v973, %v974
  %v976 = vrot.slane %v975, 4
  %v977 = vadd.f32 %v975, %v976
  %v978 = vrot.slane %v977, 2
  %v979 = vadd.f32 %v977, %v978
  %v980 = vrot.slane %v979, 1
  %v981 = vadd.f32 %v979, %v980
  %v982 = vmul.f32 %v981, 0.001953125
  %v983 = vld [vmem:[%s11] sm:$0xff]
  %v985 = vsel %vm968, %v982, 0
  %987 = vmatprep.subr.mxu0 0.0
  %988 = vmatpush1.msra.mxu0 %v983
  %989 = vmatprep.subr.mxu0 0.0
  %990 = vmatpush1.msra.mxu0 0.0
  %991 = vmatprep.subr.mxu0 0.0
  %992 = vmatpush1.msra.mxu0 0.0
  %993 = vmatprep.subr.mxu0 0.0
  %994 = vmatpush1.msra.mxu0 0.0
  %995 = vmatprep.subr.mxu0 0.0
  %996 = vmatpush1.msra.mxu0 0.0
  %997 = vmatprep.subr.mxu0 0.0
  %998 = vmatpush1.msra.mxu0 0.0
  %999 = vmatprep.subr.mxu0 0.0
  %1000 = vmatpush1.msra.mxu0 0.0
  %1001 = vmatprep.subr.mxu0 0.0
  %1002 = vmatpush1.msra.mxu0 0.0
  %1003 = vmatprep.subr.mxu0 0.0
  %1004 = vmatpush1.msra.mxu0 0.0
  %1005 = vmatprep.subr.mxu0 0.0
  %1006 = vmatpush1.msra.mxu0 0.0
  %1007 = vmatprep.subr.mxu0 0.0
  %1008 = vmatpush1.msra.mxu0 0.0
  %1009 = vmatprep.subr.mxu0 0.0
  %1010 = vmatpush1.msra.mxu0 0.0
  %1011 = vmatprep.subr.mxu0 0.0
  %1012 = vmatpush1.msra.mxu0 0.0
  %1013 = vmatprep.subr.mxu0 0.0
  %1014 = vmatpush1.msra.mxu0 0.0
  %1015 = vmatprep.subr.mxu0 0.0
  %1016 = vmatpush1.msra.mxu0 0.0
  %1017 = vmatprep.subr.mxu0 0.0
  %1018 = vmatpush1.msra.mxu0 0.0
  %1019 = vmatprep.subr.mxu0 0.0
  %1020 = vmatpush1.msra.mxu0 0.0
  %1021 = vmatprep.subr.mxu0 0.0
  %1022 = vmatpush1.msra.mxu0 0.0
  %1023 = vmatprep.subr.mxu0 0.0
  %1024 = vmatpush1.msra.mxu0 0.0
  %1025 = vmatprep.subr.mxu0 0.0
  %1026 = vmatpush1.msra.mxu0 0.0
  %1027 = vmatprep.subr.mxu0 0.0
  %1028 = vmatpush1.msra.mxu0 0.0
  %1029 = vmatprep.subr.mxu0 0.0
  %1030 = vmatpush1.msra.mxu0 0.0
  %1031 = vmatprep.subr.mxu0 0.0
  %1032 = vmatpush1.msra.mxu0 0.0
  %1033 = vmatprep.subr.mxu0 0.0
  %1034 = vmatpush1.msra.mxu0 0.0
  %1035 = vmatprep.subr.mxu0 0.0
  %1036 = vmatpush1.msra.mxu0 0.0
  %1037 = vmatprep.subr.mxu0 0.0
  %1038 = vmatpush1.msra.mxu0 0.0
  %1039 = vmatprep.subr.mxu0 0.0
  %1040 = vmatpush1.msra.mxu0 0.0
  %1041 = vmatprep.subr.mxu0 0.0
  %1042 = vmatpush1.msra.mxu0 0.0
  %1043 = vmatprep.subr.mxu0 0.0
  %1044 = vmatpush1.msra.mxu0 0.0
  %1045 = vmatprep.subr.mxu0 0.0
  %1046 = vmatpush1.msra.mxu0 0.0
  %1047 = vmatprep.subr.mxu0 0.0
  %1048 = vmatpush1.msra.mxu0 0.0
  %1049 = vmatprep.subr.mxu0 0.0
  %1050 = vmatpush1.msra.mxu0 0.0
  %1051 = vmatprep.mubr.f32.mxu0 0.0
  %1052 = vmatmul.mubr.f32.gmra.mrb[0].mxu0 %v985
  %v1053 = vpop.f32.mrb[0].mxu0
  %v1054 = vadd.f32 0.0, %v1053
  %v1055 = vpop.f32.mrb[0].mxu0
  %1056 = vdwg.mxu0
  %v1057 = vlaneseq
  %v1058 = vshrl.u32 %v1057, 7
  %v1059 = vsub.s32 0, %v1058
  %v1060 = vrot.slane %v1054, %v1059
  %v1061 = vsub.f32 %v849, %v1060
  %v1062 = vsub.f32 %v854, %v1060
  %v1063 = vsub.f32 %v859, %v1060
  %v1064 = vsub.f32 %v864, %v1060
  %v1065 = vmul.f32 %v1061, %v1061
  %v1066 = vmul.f32 %v1062, %v1062
  %v1067 = vmul.f32 %v1063, %v1063
  %v1068 = vmul.f32 %v1064, %v1064
  %1069 = vmatprep.subr.mxu0 0.0
  %1070 = vmatpush1.msra.mxu0 %v867
  %1071 = vmatprep.subr.mxu0 0.0
  %1072 = vmatpush1.msra.mxu0 %v868
  %1073 = vmatprep.subr.mxu0 0.0
  %1074 = vmatpush1.msra.mxu0 %v869
  %1075 = vmatprep.subr.mxu0 0.0
  %1076 = vmatpush1.msra.mxu0 %v870
  %1077 = vmatprep.subr.mxu0 0.0
  %1078 = vmatpush1.msra.mxu0 %v871
  %1079 = vmatprep.subr.mxu0 0.0
  %1080 = vmatpush1.msra.mxu0 %v872
  %1081 = vmatprep.subr.mxu0 0.0
  %1082 = vmatpush1.msra.mxu0 %v873
  %1083 = vmatprep.subr.mxu0 0.0
  %1084 = vmatpush1.msra.mxu0 %v874
  %1085 = vmatprep.subr.mxu0 0.0
  %1086 = vmatpush1.msra.mxu0 %v875
  %1087 = vmatprep.subr.mxu0 0.0
  %1088 = vmatpush1.msra.mxu0 %v876
  %1089 = vmatprep.subr.mxu0 0.0
  %1090 = vmatpush1.msra.mxu0 %v877
  %1091 = vmatprep.subr.mxu0 0.0
  %1092 = vmatpush1.msra.mxu0 %v878
  %1093 = vmatprep.subr.mxu0 0.0
  %1094 = vmatpush1.msra.mxu0 %v879
  %1095 = vmatprep.subr.mxu0 0.0
  %1096 = vmatpush1.msra.mxu0 %v880
  %1097 = vmatprep.subr.mxu0 0.0
  %1098 = vmatpush1.msra.mxu0 %v881
  %1099 = vmatprep.subr.mxu0 0.0
  %1100 = vmatpush1.msra.mxu0 %v882
  %1101 = vmatprep.subr.mxu0 0.0
  %1102 = vmatpush1.msra.mxu0 0.0
  %1103 = vmatprep.subr.mxu0 0.0
  %1104 = vmatpush1.msra.mxu0 0.0
  %1105 = vmatprep.subr.mxu0 0.0
  %1106 = vmatpush1.msra.mxu0 0.0
  %1107 = vmatprep.subr.mxu0 0.0
  %1108 = vmatpush1.msra.mxu0 0.0
  %1109 = vmatprep.subr.mxu0 0.0
  %1110 = vmatpush1.msra.mxu0 0.0
  %1111 = vmatprep.subr.mxu0 0.0
  %1112 = vmatpush1.msra.mxu0 0.0
  %1113 = vmatprep.subr.mxu0 0.0
  %1114 = vmatpush1.msra.mxu0 0.0
  %1115 = vmatprep.subr.mxu0 0.0
  %1116 = vmatpush1.msra.mxu0 0.0
  %1117 = vmatprep.subr.mxu0 0.0
  %1118 = vmatpush1.msra.mxu0 0.0
  %1119 = vmatprep.subr.mxu0 0.0
  %1120 = vmatpush1.msra.mxu0 0.0
  %1121 = vmatprep.subr.mxu0 0.0
  %1122 = vmatpush1.msra.mxu0 0.0
  %1123 = vmatprep.subr.mxu0 0.0
  %1124 = vmatpush1.msra.mxu0 0.0
  %1125 = vmatprep.subr.mxu0 0.0
  %1126 = vmatpush1.msra.mxu0 0.0
  %1127 = vmatprep.subr.mxu0 0.0
  %1128 = vmatpush1.msra.mxu0 0.0
  %1129 = vmatprep.subr.mxu0 0.0
  %1130 = vmatpush1.msra.mxu0 0.0
  %1131 = vmatprep.subr.mxu0 0.0
  %1132 = vmatpush1.msra.mxu0 0.0
  %1133 = vmatprep.mubr.f32.mxu0 0.0
  %1134 = vmatmul.mubr.f32.gmra.mrb[0].mxu0 %v1065
  %v1135 = vpop.f32.mrb[0].mxu0
  %v1136 = vadd.f32 0.0, %v1135
  %v1137 = vpop.f32.mrb[0].mxu0
  %1138 = vmatprep.mubr.f32.mxu0 0.0
  %1139 = vmatmul.mubr.f32.gmra.mrb[0].mxu0 %v1066
  %v1140 = vpop.f32.mrb[0].mxu0
  %v1141 = vadd.f32 0.0, %v1140
  %v1142 = vpop.f32.mrb[0].mxu0
  %1143 = vmatprep.mubr.f32.mxu0 0.0
  %1144 = vmatmul.mubr.f32.gmra.mrb[0].mxu0 %v1067
  %v1145 = vpop.f32.mrb[0].mxu0
  %v1146 = vadd.f32 0.0, %v1145
  %v1147 = vpop.f32.mrb[0].mxu0
  %1148 = vmatprep.mubr.f32.mxu0 0.0
  %1149 = vmatmul.mubr.f32.gmra.mrb[0].mxu0 %v1068
  %v1150 = vpop.f32.mrb[0].mxu0
  %v1151 = vadd.f32 0.0, %v1150
  %v1152 = vpop.f32.mrb[0].mxu0
  %1153 = vdwg.mxu0
  %v1154 = vsel %vm968, %v1136, 0.0
  %v1155 = vsel %vm968, %v1141, 0.0
  %v1156 = vadd.f32 %v1154, %v1155
  %v1157 = vsel %vm968, %v1146, 0.0
  %v1158 = vadd.f32 %v1156, %v1157
  %v1159 = vsel %vm968, %v1151, 0.0
  %v1160 = vadd.f32 %v1158, %v1159
  %v1161 = vrot.slane %v1160, 4
  %v1162 = vadd.f32 %v1160, %v1161
  %v1163 = vrot.slane %v1162, 2
  %v1164 = vadd.f32 %v1162, %v1163
  %v1165 = vrot.slane %v1164, 1
  %v1166 = vadd.f32 %v1164, %v1165
  %v1167 = vmul.f32 %v1166, 0.001953125
  %v1168 = vld [vmem:[%s4] sm:$0x1]
  %v1169 = vadd.f32 %v1167, 1e-05
  %v1170 = vrsqrt.pop %v1169
  %v1171 = vmul.f32 %v1168, %v1170
  %v1173 = vsel %vm968, %v1171, 0
  %1175 = vmatprep.subr.mxu0 0.0
  %1176 = vmatpush1.msra.mxu0 %v983
  %1177 = vmatprep.subr.mxu0 0.0
  %1178 = vmatpush1.msra.mxu0 0.0
  %1179 = vmatprep.subr.mxu0 0.0
  %1180 = vmatpush1.msra.mxu0 0.0
  %1181 = vmatprep.subr.mxu0 0.0
  %1182 = vmatpush1.msra.mxu0 0.0
  %1183 = vmatprep.subr.mxu0 0.0
  %1184 = vmatpush1.msra.mxu0 0.0
  %1185 = vmatprep.subr.mxu0 0.0
  %1186 = vmatpush1.msra.mxu0 0.0
  %1187 = vmatprep.subr.mxu0 0.0
  %1188 = vmatpush1.msra.mxu0 0.0
  %1189 = vmatprep.subr.mxu0 0.0
  %1190 = vmatpush1.msra.mxu0 0.0
  %1191 = vmatprep.subr.mxu0 0.0
  %1192 = vmatpush1.msra.mxu0 0.0
  %1193 = vmatprep.subr.mxu0 0.0
  %1194 = vmatpush1.msra.mxu0 0.0
  %1195 = vmatprep.subr.mxu0 0.0
  %1196 = vmatpush1.msra.mxu0 0.0
  %1197 = vmatprep.subr.mxu0 0.0
  %1198 = vmatpush1.msra.mxu0 0.0
  %1199 = vmatprep.subr.mxu0 0.0
  %1200 = vmatpush1.msra.mxu0 0.0
  %1201 = vmatprep.subr.mxu0 0.0
  %1202 = vmatpush1.msra.mxu0 0.0
  %1203 = vmatprep.subr.mxu0 0.0
  %1204 = vmatpush1.msra.mxu0 0.0
  %1205 = vmatprep.subr.mxu0 0.0
  %1206 = vmatpush1.msra.mxu0 0.0
  %1207 = vmatprep.subr.mxu0 0.0
  %1208 = vmatpush1.msra.mxu0 0.0
  %1209 = vmatprep.subr.mxu0 0.0
  %1210 = vmatpush1.msra.mxu0 0.0
  %1211 = vmatprep.subr.mxu0 0.0
  %1212 = vmatpush1.msra.mxu0 0.0
  %1213 = vmatprep.subr.mxu0 0.0
  %1214 = vmatpush1.msra.mxu0 0.0
  %1215 = vmatprep.subr.mxu0 0.0
  %1216 = vmatpush1.msra.mxu0 0.0
  %1217 = vmatprep.subr.mxu0 0.0
  %1218 = vmatpush1.msra.mxu0 0.0
  %1219 = vmatprep.subr.mxu0 0.0
  %1220 = vmatpush1.msra.mxu0 0.0
  %1221 = vmatprep.subr.mxu0 0.0
  %1222 = vmatpush1.msra.mxu0 0.0
  %1223 = vmatprep.subr.mxu0 0.0
  %1224 = vmatpush1.msra.mxu0 0.0
  %1225 = vmatprep.subr.mxu0 0.0
  %1226 = vmatpush1.msra.mxu0 0.0
  %1227 = vmatprep.subr.mxu0 0.0
  %1228 = vmatpush1.msra.mxu0 0.0
  %1229 = vmatprep.subr.mxu0 0.0
  %1230 = vmatpush1.msra.mxu0 0.0
  %1231 = vmatprep.subr.mxu0 0.0
  %1232 = vmatpush1.msra.mxu0 0.0
  %1233 = vmatprep.subr.mxu0 0.0
  %1234 = vmatpush1.msra.mxu0 0.0
  %1235 = vmatprep.subr.mxu0 0.0
  %1236 = vmatpush1.msra.mxu0 0.0
  %1237 = vmatprep.subr.mxu0 0.0
  %1238 = vmatpush1.msra.mxu0 0.0
  %1239 = vmatprep.mubr.f32.mxu0 0.0
  %1240 = vmatmul.mubr.f32.gmra.mrb[0].mxu0 %v1173
  %v1241 = vpop.f32.mrb[0].mxu0
  %v1242 = vadd.f32 0.0, %v1241
  %v1243 = vpop.f32.mrb[0].mxu0
  %1244 = vdwg.mxu0
  %v1245 = vld [vmem:[%s5] sm:$0x1]
  %v1247 = vsel %vm968, %v1245, 0
  %1249 = vmatprep.subr.mxu0 0.0
  %1250 = vmatpush1.msra.mxu0 %v983
  %1251 = vmatprep.subr.mxu0 0.0
  %1252 = vmatpush1.msra.mxu0 0.0
  %1253 = vmatprep.subr.mxu0 0.0
  %1254 = vmatpush1.msra.mxu0 0.0
  %1255 = vmatprep.subr.mxu0 0.0
  %1256 = vmatpush1.msra.mxu0 0.0
  %1257 = vmatprep.subr.mxu0 0.0
  %1258 = vmatpush1.msra.mxu0 0.0
  %1259 = vmatprep.subr.mxu0 0.0
  %1260 = vmatpush1.msra.mxu0 0.0
  %1261 = vmatprep.subr.mxu0 0.0
  %1262 = vmatpush1.msra.mxu0 0.0
  %1263 = vmatprep.subr.mxu0 0.0
  %1264 = vmatpush1.msra.mxu0 0.0
  %1265 = vmatprep.subr.mxu0 0.0
  %1266 = vmatpush1.msra.mxu0 0.0
  %1267 = vmatprep.subr.mxu0 0.0
  %1268 = vmatpush1.msra.mxu0 0.0
  %1269 = vmatprep.subr.mxu0 0.0
  %1270 = vmatpush1.msra.mxu0 0.0
  %1271 = vmatprep.subr.mxu0 0.0
  %1272 = vmatpush1.msra.mxu0 0.0
  %1273 = vmatprep.subr.mxu0 0.0
  %1274 = vmatpush1.msra.mxu0 0.0
  %1275 = vmatprep.subr.mxu0 0.0
  %1276 = vmatpush1.msra.mxu0 0.0
  %1277 = vmatprep.subr.mxu0 0.0
  %1278 = vmatpush1.msra.mxu0 0.0
  %1279 = vmatprep.subr.mxu0 0.0
  %1280 = vmatpush1.msra.mxu0 0.0
  %1281 = vmatprep.subr.mxu0 0.0
  %1282 = vmatpush1.msra.mxu0 0.0
  %1283 = vmatprep.subr.mxu0 0.0
  %1284 = vmatpush1.msra.mxu0 0.0
  %1285 = vmatprep.subr.mxu0 0.0
  %1286 = vmatpush1.msra.mxu0 0.0
  %1287 = vmatprep.subr.mxu0 0.0
  %1288 = vmatpush1.msra.mxu0 0.0
  %1289 = vmatprep.subr.mxu0 0.0
  %1290 = vmatpush1.msra.mxu0 0.0
  %1291 = vmatprep.subr.mxu0 0.0
  %1292 = vmatpush1.msra.mxu0 0.0
  %1293 = vmatprep.subr.mxu0 0.0
  %1294 = vmatpush1.msra.mxu0 0.0
  %1295 = vmatprep.subr.mxu0 0.0
  %1296 = vmatpush1.msra.mxu0 0.0
  %1297 = vmatprep.subr.mxu0 0.0
  %1298 = vmatpush1.msra.mxu0 0.0
  %1299 = vmatprep.subr.mxu0 0.0
  %1300 = vmatpush1.msra.mxu0 0.0
  %1301 = vmatprep.subr.mxu0 0.0
  %1302 = vmatpush1.msra.mxu0 0.0
  %1303 = vmatprep.subr.mxu0 0.0
  %1304 = vmatpush1.msra.mxu0 0.0
  %1305 = vmatprep.subr.mxu0 0.0
  %1306 = vmatpush1.msra.mxu0 0.0
  %1307 = vmatprep.subr.mxu0 0.0
  %1308 = vmatpush1.msra.mxu0 0.0
  %1309 = vmatprep.subr.mxu0 0.0
  %1310 = vmatpush1.msra.mxu0 0.0
  %1311 = vmatprep.subr.mxu0 0.0
  %1312 = vmatpush1.msra.mxu0 0.0
  %1313 = vmatprep.mubr.f32.mxu0 0.0
  %1314 = vmatmul.mubr.f32.gmra.mrb[0].mxu0 %v1247
  %v1315 = vpop.f32.mrb[0].mxu0
  %v1316 = vadd.f32 0.0, %v1315
  %v1317 = vpop.f32.mrb[0].mxu0
  %1318 = vdwg.mxu0
  %v1319 = vlaneseq
  %v1320 = vshrl.u32 %v1319, 7
  %v1321 = vsub.s32 0, %v1320
  %v1322 = vrot.slane %v1242, %v1321
  %v1323 = vmul.f32 %v1061, %v1322
  %v1324 = vmul.f32 %v1062, %v1322
  %v1325 = vmul.f32 %v1063, %v1322
  %v1326 = vmul.f32 %v1064, %v1322
  %v1327 = vlaneseq
  %v1328 = vshrl.u32 %v1327, 7
  %v1329 = vsub.s32 0, %v1328
  %v1330 = vrot.slane %v1316, %v1329
  %v1331 = vadd.f32 %v1323, %v1330
  %v1332 = vadd.f32 %v1324, %v1330
  %v1333 = vadd.f32 %v1325, %v1330
  %v1334 = vadd.f32 %v1326, %v1330
  %v1335 = vmax.f32 %v1331, 0.0
  %v1336 = vmax.f32 %v1332, 0.0
  %v1337 = vmax.f32 %v1333, 0.0
  %v1338 = vmax.f32 %v1334, 0.0
  %v1339 = vrot.slane %v1335, 7
  %v1340 = vrot.slane %v1336, 7
  %v1341 = vrot.slane %v1337, 7
  %v1342 = vrot.slane %v1338, 7
  %v1343 = vsel %vm704, %v1341, %v1342
  %v1344 = vsel %vm704, %v1340, %v1341
  %v1345 = vsel %vm704, %v1339, %v1340
  %v1346 = vsel %vm704, %v1342, %v1339
  %v1347 = vsel %vm696, 0.0, %v1346
  %v1348 = vsel %vm697, 0.0, %v1345
  %v1349 = vsel %vm698, 0.0, %v1344
  %v1350 = vsel %vm699, 0.0, %v1343
  %v1351 = vrot.slane %v1335, 1
  %v1352 = vrot.slane %v1336, 1
  %v1353 = vrot.slane %v1337, 1
  %v1354 = vrot.slane %v1338, 1
  %v1355 = vsel %vm721, %v1353, %v1354
  %v1356 = vsel %vm721, %v1352, %v1353
  %v1357 = vsel %vm721, %v1351, %v1352
  %v1358 = vsel %vm721, %v1354, %v1351
  %v1359 = vsel %vm713, 0.0, %v1357
  %v1360 = vsel %vm714, 0.0, %v1356
  %v1361 = vsel %vm715, 0.0, %v1355
  %v1362 = vsel %vm716, 0.0, %v1358
  %v1363 = vld [vmem:[%s6] sm:$0xff]
  %v1364 = vld [vmem:[%s6 + $0x8] sm:$0xff]
  %v1365 = vld [vmem:[%s6 + $0x10] sm:$0xff]
  %v1366 = vld [vmem:[%s6 + $0x18] sm:$0xff]
  %v1367 = vld [vmem:[%s6 + $0x20] sm:$0xff]
  %v1368 = vld [vmem:[%s6 + $0x28] sm:$0xff]
  %v1369 = vld [vmem:[%s6 + $0x30] sm:$0xff]
  %v1370 = vld [vmem:[%s6 + $0x38] sm:$0xff]
  %v1371 = vld [vmem:[%s6 + $0x40] sm:$0xff]
  %v1372 = vld [vmem:[%s6 + $0x48] sm:$0xff]
  %v1373 = vld [vmem:[%s6 + $0x50] sm:$0xff]
  %v1374 = vld [vmem:[%s6 + $0x58] sm:$0xff]
  %v1375 = vld [vmem:[%s6 + $0x60] sm:$0xff]
  %v1376 = vld [vmem:[%s6 + $0x68] sm:$0xff]
  %v1377 = vld [vmem:[%s6 + $0x70] sm:$0xff]
  %v1378 = vld [vmem:[%s6 + $0x78] sm:$0xff]
  %v1379 = vld [vmem:[%s6 + $0x80] sm:$0xff]
  %v1380 = vld [vmem:[%s6 + $0x88] sm:$0xff]
  %v1381 = vld [vmem:[%s6 + $0x90] sm:$0xff]
  %v1382 = vld [vmem:[%s6 + $0x98] sm:$0xff]
  %v1383 = vld [vmem:[%s6 + $0xa0] sm:$0xff]
  %v1384 = vld [vmem:[%s6 + $0xa8] sm:$0xff]
  %v1385 = vld [vmem:[%s6 + $0xb0] sm:$0xff]
  %v1386 = vld [vmem:[%s6 + $0xb8] sm:$0xff]
  %v1387 = vld [vmem:[%s6 + $0xc0] sm:$0xff]
  %v1388 = vld [vmem:[%s6 + $0xc8] sm:$0xff]
  %v1389 = vld [vmem:[%s6 + $0xd0] sm:$0xff]
  %v1390 = vld [vmem:[%s6 + $0xd8] sm:$0xff]
  %v1391 = vld [vmem:[%s6 + $0xe0] sm:$0xff]
  %v1392 = vld [vmem:[%s6 + $0xe8] sm:$0xff]
  %v1393 = vld [vmem:[%s6 + $0xf0] sm:$0xff]
  %v1394 = vld [vmem:[%s6 + $0xf8] sm:$0xff]
  %v1395 = vld [vmem:[%s6 + $0x100] sm:$0xff]
  %v1396 = vld [vmem:[%s6 + $0x108] sm:$0xff]
  %v1397 = vld [vmem:[%s6 + $0x110] sm:$0xff]
  %v1398 = vld [vmem:[%s6 + $0x118] sm:$0xff]
  %v1399 = vld [vmem:[%s6 + $0x120] sm:$0xff]
  %v1400 = vld [vmem:[%s6 + $0x128] sm:$0xff]
  %v1401 = vld [vmem:[%s6 + $0x130] sm:$0xff]
  %v1402 = vld [vmem:[%s6 + $0x138] sm:$0xff]
  %v1403 = vld [vmem:[%s6 + $0x140] sm:$0xff]
  %v1404 = vld [vmem:[%s6 + $0x148] sm:$0xff]
  %v1405 = vld [vmem:[%s6 + $0x150] sm:$0xff]
  %v1406 = vld [vmem:[%s6 + $0x158] sm:$0xff]
  %v1407 = vld [vmem:[%s6 + $0x160] sm:$0xff]
  %v1408 = vld [vmem:[%s6 + $0x168] sm:$0xff]
  %v1409 = vld [vmem:[%s6 + $0x170] sm:$0xff]
  %v1410 = vld [vmem:[%s6 + $0x178] sm:$0xff]
  %1411 = vmatprep.subr.mxu0 0.0
  %1412 = vmatpush1.msra.mxu0 %v1363
  %1413 = vmatprep.subr.mxu0 0.0
  %1414 = vmatpush1.msra.mxu0 %v1364
  %1415 = vmatprep.subr.mxu0 0.0
  %1416 = vmatpush1.msra.mxu0 %v1365
  %1417 = vmatprep.subr.mxu0 0.0
  %1418 = vmatpush1.msra.mxu0 %v1366
  %1419 = vmatprep.subr.mxu0 0.0
  %1420 = vmatpush1.msra.mxu0 %v1367
  %1421 = vmatprep.subr.mxu0 0.0
  %1422 = vmatpush1.msra.mxu0 %v1368
  %1423 = vmatprep.subr.mxu0 0.0
  %1424 = vmatpush1.msra.mxu0 %v1369
  %1425 = vmatprep.subr.mxu0 0.0
  %1426 = vmatpush1.msra.mxu0 %v1370
  %1427 = vmatprep.subr.mxu0 0.0
  %1428 = vmatpush1.msra.mxu0 %v1371
  %1429 = vmatprep.subr.mxu0 0.0
  %1430 = vmatpush1.msra.mxu0 %v1372
  %1431 = vmatprep.subr.mxu0 0.0
  %1432 = vmatpush1.msra.mxu0 %v1373
  %1433 = vmatprep.subr.mxu0 0.0
  %1434 = vmatpush1.msra.mxu0 %v1374
  %1435 = vmatprep.subr.mxu0 0.0
  %1436 = vmatpush1.msra.mxu0 %v1375
  %1437 = vmatprep.subr.mxu0 0.0
  %1438 = vmatpush1.msra.mxu0 %v1376
  %1439 = vmatprep.subr.mxu0 0.0
  %1440 = vmatpush1.msra.mxu0 %v1377
  %1441 = vmatprep.subr.mxu0 0.0
  %1442 = vmatpush1.msra.mxu0 %v1378
  %1443 = vmatprep.subr.mxu0 0.0
  %1444 = vmatpush1.msra.mxu0 %v1379
  %1445 = vmatprep.subr.mxu0 0.0
  %1446 = vmatpush1.msra.mxu0 %v1380
  %1447 = vmatprep.subr.mxu0 0.0
  %1448 = vmatpush1.msra.mxu0 %v1381
  %1449 = vmatprep.subr.mxu0 0.0
  %1450 = vmatpush1.msra.mxu0 %v1382
  %1451 = vmatprep.subr.mxu0 0.0
  %1452 = vmatpush1.msra.mxu0 %v1383
  %1453 = vmatprep.subr.mxu0 0.0
  %1454 = vmatpush1.msra.mxu0 %v1384
  %1455 = vmatprep.subr.mxu0 0.0
  %1456 = vmatpush1.msra.mxu0 %v1385
  %1457 = vmatprep.subr.mxu0 0.0
  %1458 = vmatpush1.msra.mxu0 %v1386
  %1459 = vmatprep.subr.mxu0 0.0
  %1460 = vmatpush1.msra.mxu0 %v1387
  %1461 = vmatprep.subr.mxu0 0.0
  %1462 = vmatpush1.msra.mxu0 %v1388
  %1463 = vmatprep.subr.mxu0 0.0
  %1464 = vmatpush1.msra.mxu0 %v1389
  %1465 = vmatprep.subr.mxu0 0.0
  %1466 = vmatpush1.msra.mxu0 %v1390
  %1467 = vmatprep.subr.mxu0 0.0
  %1468 = vmatpush1.msra.mxu0 %v1391
  %1469 = vmatprep.subr.mxu0 0.0
  %1470 = vmatpush1.msra.mxu0 %v1392
  %1471 = vmatprep.subr.mxu0 0.0
  %1472 = vmatpush1.msra.mxu0 %v1393
  %1473 = vmatprep.subr.mxu0 0.0
  %1474 = vmatpush1.msra.mxu0 %v1394
  %1475 = vmatprep.mubr.f32.mxu0 %v1335
  %1476 = vmatmul.mubr.f32.gmra.mrb[0].mxu0 %v1347
  %v1477 = vpop.f32.mrb[0].mxu0
  %v1478 = vadd.f32 0.0, %v1477
  %v1479 = vpop.f32.mrb[0].mxu0
  %1480 = vmatprep.mubr.f32.mxu0 %v1336
  %1481 = vmatmul.mubr.f32.gmra.mrb[0].mxu0 %v1348
  %v1482 = vpop.f32.mrb[0].mxu0
  %v1483 = vadd.f32 0.0, %v1482
  %v1484 = vpop.f32.mrb[0].mxu0
  %1485 = vmatprep.mubr.f32.mxu0 %v1337
  %1486 = vmatmul.mubr.f32.gmra.mrb[0].mxu0 %v1349
  %v1487 = vpop.f32.mrb[0].mxu0
  %v1488 = vadd.f32 0.0, %v1487
  %v1489 = vpop.f32.mrb[0].mxu0
  %1490 = vmatprep.mubr.f32.mxu0 %v1338
  %1491 = vmatmul.mubr.f32.gmra.mrb[0].mxu0 %v1350
  %v1492 = vpop.f32.mrb[0].mxu0
  %v1493 = vadd.f32 0.0, %v1492
  %v1494 = vpop.f32.mrb[0].mxu0
  %1495 = vdwg.mxu0
  %1496 = vmatprep.subr.mxu0 0.0
  %1497 = vmatpush1.msra.mxu0 %v1395
  %1498 = vmatprep.subr.mxu0 0.0
  %1499 = vmatpush1.msra.mxu0 %v1396
  %1500 = vmatprep.subr.mxu0 0.0
  %1501 = vmatpush1.msra.mxu0 %v1397
  %1502 = vmatprep.subr.mxu0 0.0
  %1503 = vmatpush1.msra.mxu0 %v1398
  %1504 = vmatprep.subr.mxu0 0.0
  %1505 = vmatpush1.msra.mxu0 %v1399
  %1506 = vmatprep.subr.mxu0 0.0
  %1507 = vmatpush1.msra.mxu0 %v1400
  %1508 = vmatprep.subr.mxu0 0.0
  %1509 = vmatpush1.msra.mxu0 %v1401
  %1510 = vmatprep.subr.mxu0 0.0
  %1511 = vmatpush1.msra.mxu0 %v1402
  %1512 = vmatprep.subr.mxu0 0.0
  %1513 = vmatpush1.msra.mxu0 %v1403
  %1514 = vmatprep.subr.mxu0 0.0
  %1515 = vmatpush1.msra.mxu0 %v1404
  %1516 = vmatprep.subr.mxu0 0.0
  %1517 = vmatpush1.msra.mxu0 %v1405
  %1518 = vmatprep.subr.mxu0 0.0
  %1519 = vmatpush1.msra.mxu0 %v1406
  %1520 = vmatprep.subr.mxu0 0.0
  %1521 = vmatpush1.msra.mxu0 %v1407
  %1522 = vmatprep.subr.mxu0 0.0
  %1523 = vmatpush1.msra.mxu0 %v1408
  %1524 = vmatprep.subr.mxu0 0.0
  %1525 = vmatpush1.msra.mxu0 %v1409
  %1526 = vmatprep.subr.mxu0 0.0
  %1527 = vmatpush1.msra.mxu0 %v1410
  %1528 = vmatprep.subr.mxu0 0.0
  %1529 = vmatpush1.msra.mxu0 0.0
  %1530 = vmatprep.subr.mxu0 0.0
  %1531 = vmatpush1.msra.mxu0 0.0
  %1532 = vmatprep.subr.mxu0 0.0
  %1533 = vmatpush1.msra.mxu0 0.0
  %1534 = vmatprep.subr.mxu0 0.0
  %1535 = vmatpush1.msra.mxu0 0.0
  %1536 = vmatprep.subr.mxu0 0.0
  %1537 = vmatpush1.msra.mxu0 0.0
  %1538 = vmatprep.subr.mxu0 0.0
  %1539 = vmatpush1.msra.mxu0 0.0
  %1540 = vmatprep.subr.mxu0 0.0
  %1541 = vmatpush1.msra.mxu0 0.0
  %1542 = vmatprep.subr.mxu0 0.0
  %1543 = vmatpush1.msra.mxu0 0.0
  %1544 = vmatprep.subr.mxu0 0.0
  %1545 = vmatpush1.msra.mxu0 0.0
  %1546 = vmatprep.subr.mxu0 0.0
  %1547 = vmatpush1.msra.mxu0 0.0
  %1548 = vmatprep.subr.mxu0 0.0
  %1549 = vmatpush1.msra.mxu0 0.0
  %1550 = vmatprep.subr.mxu0 0.0
  %1551 = vmatpush1.msra.mxu0 0.0
  %1552 = vmatprep.subr.mxu0 0.0
  %1553 = vmatpush1.msra.mxu0 0.0
  %1554 = vmatprep.subr.mxu0 0.0
  %1555 = vmatpush1.msra.mxu0 0.0
  %1556 = vmatprep.subr.mxu0 0.0
  %1557 = vmatpush1.msra.mxu0 0.0
  %1558 = vmatprep.subr.mxu0 0.0
  %1559 = vmatpush1.msra.mxu0 0.0
  %1560 = vmatprep.mubr.f32.mxu0 0.0
  %1561 = vmatmul.mubr.f32.gmra.mrb[0].mxu0 %v1359
  %v1562 = vpop.f32.mrb[0].mxu0
  %v1563 = vadd.f32 %v1478, %v1562
  %v1564 = vpop.f32.mrb[0].mxu0
  %1565 = vmatprep.mubr.f32.mxu0 0.0
  %1566 = vmatmul.mubr.f32.gmra.mrb[0].mxu0 %v1360
  %v1567 = vpop.f32.mrb[0].mxu0
  %v1568 = vadd.f32 %v1483, %v1567
  %v1569 = vpop.f32.mrb[0].mxu0
  %1570 = vmatprep.mubr.f32.mxu0 0.0
  %1571 = vmatmul.mubr.f32.gmra.mrb[0].mxu0 %v1361
  %v1572 = vpop.f32.mrb[0].mxu0
  %v1573 = vadd.f32 %v1488, %v1572
  %v1574 = vpop.f32.mrb[0].mxu0
  %1575 = vmatprep.mubr.f32.mxu0 0.0
  %1576 = vmatmul.mubr.f32.gmra.mrb[0].mxu0 %v1362
  %v1577 = vpop.f32.mrb[0].mxu0
  %v1578 = vadd.f32 %v1493, %v1577
  %v1579 = vpop.f32.mrb[0].mxu0
  %1580 = vdwg.mxu0
  %v1581 = vmul.f32 %v1563, 0.2
  %v1582 = vmul.f32 %v1568, 0.2
  %v1583 = vmul.f32 %v1573, 0.2
  %v1584 = vmul.f32 %v1578, 0.2
  %v1585 = vadd.f32 %v1581, %v625
  %v1586 = vadd.f32 %v1582, %v630
  %v1587 = vadd.f32 %v1583, %v635
  %v1588 = vadd.f32 %v1584, %v640
  %1589 = vst [vmem:[%s12] sm:$0xff] %v1585
  %1590 = vst [vmem:[%s12 + $0x8] sm:$0xff] %v1586
  %1591 = vst [vmem:[%s12 + $0x10] sm:$0xff] %v1587
  %1592 = vst [vmem:[%s12 + $0x18] sm:$0xff] %v1588
  // Predicated region
  $region50: #{basic_block_forward.1} parent=0 // pred_check
    _
  $region51: #{basic_block_forward.1} parent=0 // pred_check_branch
    %1594 = sbr.rel (0) target = $region53
  $region52: #{basic_block_forward.1} parent=0 // pred_region
    _
  $region53: #{basic_block_forward.1} parent=0 // pred_fallthru
    _
  // Predicated region
  $region54: #{basic_block_forward.1} parent=0 // pred_check
    _
  $region55: #{basic_block_forward.1} parent=0 // pred_check_branch
    %1596 = sbr.rel (0) target = $region57
  $region56: #{basic_block_forward.1} parent=0 // pred_region
    _
  $region57: #{basic_block_forward.1} parent=0 // pred_fallthru
    _

</llo_original>
